<compile_context>
chip_gen: v7x
topology: tpu7x:2x2x1
jax: 0.10.0
libtpu: 0.0.40
codegen_flags: <defaults>
</compile_context>

<pallas_src>
import functools

import jax
import jax.numpy as jnp
import numpy as np
from jax import lax
from jax.experimental import pallas as pl
from jax.experimental.pallas import tpu as pltpu


def _round_up(x, m):
    return (x + m - 1) // m * m


def lstm_recurrence_kernel(gx_ref, whh_ref, hs_ref, h_ref, c_ref, *, unroll):
    """One grid step = T_BLK LSTM time steps for one batch block.

    gx_ref : (T_BLK, B_BLK, 4*HP)  precomputed x_t @ W_ih^T + (b_ih + b_hh)
    whh_ref: (HP, 4*HP)            W_hh^T, gate blocks padded to HP lanes each
    hs_ref : (T_BLK, B_BLK, HP)    hidden states h_t for these time steps (output, f32)
    h_ref, c_ref : (B_BLK, HP)     recurrent state, persists across time blocks
    """
    t_blk_idx = pl.program_id(1)          # time-block index (sequential / "arbitrary")

    @pl.when(t_blk_idx == 0)
    def _():                               # fresh state at the start of each batch block
        h_ref[...] = jnp.zeros_like(h_ref)
        c_ref[...] = jnp.zeros_like(c_ref)

    HP = h_ref.shape[-1]
    whh = whh_ref[...]                     # resident weights; hoisted out of the loop
    n_steps = gx_ref.shape[0]

    def sigm(x):                           # one tanh EUP push instead of exp+reciprocal
        return 0.5 * (1.0 + jnp.tanh(0.5 * x))

    def body(t, carry):
        h = h_ref[...]
        gates = (jnp.dot(h.astype(whh.dtype), whh,
                         preferred_element_type=jnp.float32)
                 + gx_ref[t].astype(jnp.float32))           # (B_BLK, 4*HP), f32

        # PyTorch LSTM gate order: input, forget, cell(g), output.
        # Each slice is a full multiple of 128 lanes -> no cross-lane relayout.
        i_g = sigm(gates[:, 0 * HP:1 * HP])
        f_g = sigm(gates[:, 1 * HP:2 * HP])
        g_g = jnp.tanh(gates[:, 2 * HP:3 * HP])
        o_g = sigm(gates[:, 3 * HP:4 * HP])

        c_new = f_g * c_ref[...] + i_g * g_g
        h_new = o_g * jnp.tanh(c_new)
        c_ref[...] = c_new
        h_ref[...] = h_new
        hs_ref[t] = h_new                                   # lane-dense (B_BLK, 128k) store
        return carry

    # TODO(synk): split the (HP,4HP) dot into per-gate (HP,HP) dots (or hold W_hh in MXU
    # weight regs via matmul_push_rhs/matmul_acc_lhs) and interleave gate activations
    # under the MXU drain, once a bundle dump confirms the drain dominates the step.
    lax.fori_loop(0, n_steps, body, 0, unroll=unroll)


def ad_sequence_model_forward(tokens, params, *, t_blk=32, b_blk=128,
                              matmul_dtype=jnp.float32,
                              core_parallel_batch=False):
    """tokens: (B, S) int32 -> (B, S, output_size) float32.

    matmul_dtype: set to jnp.bfloat16 on v6e/v7x for MXU-native recurrent matmul
      operands and a halved gx HBM stream (accumulation and h/c state stay f32;
      relax the demo's 1e-4 tolerance in that case).
    core_parallel_batch: on v7x, shard independent batch blocks across the 2 TCs.
    """
    emb, w_ih, w_hh, b_ih, b_hh, w_fc, b_fc = (
        params["embedding"], params["w_ih"], params["w_hh"],
        params["b_ih"], params["b_hh"], params["w_fc"], params["b_fc"])

    B, S = tokens.shape
    H = w_hh.shape[1]
    HP = _round_up(H, 128)          # lane-pad hidden dim -> lane-aligned gate slices

    # ---- effective tile sizes (never pad a tiny batch/seq up to the requested block) ----
    b_eff = max(8, min(_round_up(b_blk, 8), _round_up(B, 8)))
    t_eff = max(1, min(t_blk, S))

    gx_item = jnp.dtype(matmul_dtype).itemsize
    budget = 28 << 20               # keep double-buffered tiles under v7x's 32 MiB scoped VMEM

    def _tile_bytes(t):             # double-buffered gx tile + double-buffered hs tile
        return 2 * t * b_eff * HP * (4 * gx_item + 4)

    while t_eff > 8 and _tile_bytes(t_eff) > budget:
        t_eff = (t_eff + 1) // 2

    BP = _round_up(B, b_eff)        # sublane-pad batch
    SP = _round_up(S, t_eff)        # time padded to a whole number of time blocks

    # ---- repack weights: per-gate zero padding H -> HP along the gate axis ----
    def gate_pad_t(w):              # w: (4H, in_dim) torch layout -> (in_dim, 4*HP)
        in_dim = w.shape[1]
        w4 = w.reshape(4, H, in_dim)                     # (4, H, in)
        w4 = jnp.transpose(w4, (2, 0, 1))                # (in, 4, H)
        w4 = jnp.pad(w4, ((0, 0), (0, 0), (0, HP - H)))  # (in, 4, HP), zero pad
        return w4.reshape(in_dim, 4 * HP)

    wih_t = gate_pad_t(w_ih)                                     # (E, 4HP)
    whh_t = jnp.pad(gate_pad_t(w_hh), ((0, HP - H), (0, 0)))     # (HP, 4HP)
    whh_t = whh_t.astype(matmul_dtype)
    bias = jnp.pad((b_ih + b_hh).reshape(4, H),
                   ((0, 0), (0, HP - H))).reshape(4 * HP)        # (4HP,)

    # ---- embedding gather fused with batch_first -> time-major transpose ----
    tok_p = jnp.pad(tokens, ((0, BP - B), (0, 0)))               # pad batch with token 0
    x_tm = jnp.take(emb, tok_p.T, axis=0)                        # (S, BP, E)

    # ---- input projection hoisted out of the recurrence: one big matmul (XLA) ----
    gx = jnp.einsum('sbe,ef->sbf', x_tm, wih_t,
                    preferred_element_type=jnp.float32) + bias   # (S, BP, 4HP), f32
    gx = gx.astype(matmul_dtype)                                 # bf16 stream when requested
    gx = jnp.pad(gx, ((0, SP - S), (0, 0), (0, 0)))              # (SP, BP, 4HP)

    n_b = BP // b_eff
    n_t = SP // t_eff

    # ---- explicit VMEM budget (v5e scoped default is 16 MiB; v7x physical is 64 MiB) ----
    whh_bytes = HP * 4 * HP * gx_item
    scratch_bytes = 2 * b_eff * HP * 4
    vmem_needed = _tile_bytes(t_eff) + 2 * whh_bytes + scratch_bytes
    vmem_limit = int(min(max(vmem_needed + (8 << 20), 32 << 20), 56 << 20))

    batch_sem = pltpu.CORE_PARALLEL if core_parallel_batch else "parallel"
    kernel = functools.partial(lstm_recurrence_kernel, unroll=max(1, min(8, t_eff)))

    hs = pl.pallas_call(
        kernel,
        out_shape=jax.ShapeDtypeStruct((SP, BP, HP), jnp.float32),
        grid_spec=pltpu.PrefetchScalarGridSpec(
            num_scalar_prefetch=0,
            grid=(n_b, n_t),                 # batch blocks parallel, time sequential
            in_specs=[
                pl.BlockSpec((t_eff, b_eff, 4 * HP), lambda b, t: (t, b, 0)),
                # W_hh^T block index never changes; Pallas keeps it resident across steps.
                pl.BlockSpec((HP, 4 * HP), lambda b, t: (0, 0)),
            ],
            out_specs=pl.BlockSpec((t_eff, b_eff, HP), lambda b, t: (t, b, 0)),
            scratch_shapes=[
                pltpu.VMEM((b_eff, HP), jnp.float32),   # h state
                pltpu.VMEM((b_eff, HP), jnp.float32),   # c state
            ],
        ),
        compiler_params=pltpu.CompilerParams(
            dimension_semantics=(batch_sem, "arbitrary"),
            vmem_limit_bytes=vmem_limit),
    )(gx, whh_t)

    # ---- final Linear on the padded slab (padded hidden lanes are exact zeros, so a
    #      zero-padded W_fc is mathematically identical; no :H relayout of the slab) ----
    w_fc_p = jnp.pad(w_fc, ((0, 0), (0, HP - H)))                # (O, HP)
    out = jnp.einsum('sbh,oh->bso', hs, w_fc_p,
                     preferred_element_type=jnp.float32) + b_fc  # (BP, SP, O)
    return out[:B, :S, :]                                        # drop batch/time padding


def ad_sequence_model_ref(tokens, params):
    """Pure-JAX reference matching nn.Embedding -> nn.LSTM -> nn.Linear."""
    emb, w_ih, w_hh, b_ih, b_hh, w_fc, b_fc = (
        params["embedding"], params["w_ih"], params["w_hh"],
        params["b_ih"], params["b_hh"], params["w_fc"], params["b_fc"])
    x = jnp.take(emb, tokens, axis=0)                # (B, S, E)
    B = x.shape[0]
    H = w_hh.shape[1]

    def step(carry, x_t):
        h, c = carry
        gates = x_t @ w_ih.T + h @ w_hh.T + b_ih + b_hh
        i, f, g, o = jnp.split(gates, 4, axis=-1)
        i, f, o = jax.nn.sigmoid(i), jax.nn.sigmoid(f), jax.nn.sigmoid(o)
        g = jnp.tanh(g)
        c = f * c + i * g
        h = o * jnp.tanh(c)
        return (h, c), h

    h0 = jnp.zeros((B, H), jnp.float32)
    c0 = jnp.zeros((B, H), jnp.float32)
    _, hs = jax.lax.scan(step, (h0, c0), jnp.transpose(x, (1, 0, 2)))  # (S, B, H)
    out = hs @ w_fc.T + b_fc                                           # (S, B, O)
    return jnp.transpose(out, (1, 0, 2))


def init_params(key, vocab_size, embed_size, hidden_size, output_size):
    ks = jax.random.split(key, 7)
    s = 0.1
    return {
        "embedding": s * jax.random.normal(ks[0], (vocab_size, embed_size), jnp.float32),
        "w_ih": s * jax.random.normal(ks[1], (4 * hidden_size, embed_size), jnp.float32),
        "w_hh": s * jax.random.normal(ks[2], (4 * hidden_size, hidden_size), jnp.float32),
        "b_ih": s * jax.random.normal(ks[3], (4 * hidden_size,), jnp.float32),
        "b_hh": s * jax.random.normal(ks[4], (4 * hidden_size,), jnp.float32),
        "w_fc": s * jax.random.normal(ks[5], (output_size, hidden_size), jnp.float32),
        "b_fc": s * jax.random.normal(ks[6], (output_size,), jnp.float32),
    }


if __name__ == "__main__":
    vocab_size, embed_size, hidden_size, output_size = 50, 32, 32, 16
    batch, seq = 2, 8

    key = jax.random.PRNGKey(0)
    k_tok, k_param = jax.random.split(key)
    params = init_params(k_param, vocab_size, embed_size, hidden_size, output_size)
    tokens = jax.random.randint(k_tok, (batch, seq), 0, vocab_size, dtype=jnp.int32)

    out = ad_sequence_model_forward(tokens, params)
    out = jax.block_until_ready(out)

    ref = jax.block_until_ready(ad_sequence_model_ref(tokens, params))
    np.testing.assert_allclose(np.asarray(out), np.asarray(ref), rtol=1e-4, atol=1e-4)

    assert out.shape == (batch, seq, output_size)
    print("KERNEL_OK")
</pallas_src>

<mosaic_0001>
module attributes {stable_mosaic.version = 11 : i64} {
  func.func @lstm_recurrence_kernel(%arg0: i32, %arg1: i32, %arg2: memref<8x8x512xf32, #tpu.memory_space<vmem>>, %arg3: memref<128x512xf32, #tpu.memory_space<vmem>>, %arg4: memref<8x8x128xf32, #tpu.memory_space<vmem>>, %arg5: memref<8x128xf32, #tpu.memory_space<vmem>>, %arg6: memref<8x128xf32, #tpu.memory_space<vmem>>) attributes {dimension_semantics = [#tpu.dimension_semantics<parallel>, #tpu.dimension_semantics<arbitrary>], iteration_bounds = array<i64: 1, 1>, scalar_prefetch = 0 : i64, scratch_operands = 2 : i64, tpu.core_type = #tpu.core_type<tc>, window_params = [{transform_indices = @transform_0, window_bounds = array<i64: 8, 8, 512>}, {pipeline_mode = #tpu.pipeline_mode<synchronous>, transform_indices = @transform_1, window_bounds = array<i64: 128, 512>}, {transform_indices = @transform_2, window_bounds = array<i64: 8, 8, 128>}]} {
    %c0_i32 = arith.constant 0 : i32
    %0 = arith.cmpi eq, %arg1, %c0_i32 : i32
    %1 = arith.extui %0 : i1 to i32
    %c0_i32_0 = arith.constant 0 : i32
    %2 = arith.cmpi ne, %1, %c0_i32_0 : i32
    scf.if %2 {
      %cst_178 = arith.constant 0.000000e+00 : f32
      %356 = vector.broadcast %cst_178 : f32 to vector<8x128xf32>
      %c0_179 = arith.constant 0 : index
      %c0_180 = arith.constant 0 : index
      %357 = vector.load %arg5[%c0_179, %c0_180] : memref<8x128xf32, #tpu.memory_space<vmem>>, vector<8x128xf32>
      tpu.vector_store %arg5[%c0_179, %c0_180], %356 {strides = array<i32>} : memref<8x128xf32, #tpu.memory_space<vmem>>, vector<8x128xf32>,
      %cst_181 = arith.constant 0.000000e+00 : f32
      %358 = vector.broadcast %cst_181 : f32 to vector<8x128xf32>
      %c0_182 = arith.constant 0 : index
      %c0_183 = arith.constant 0 : index
      %359 = vector.load %arg6[%c0_182, %c0_183] : memref<8x128xf32, #tpu.memory_space<vmem>>, vector<8x128xf32>
      tpu.vector_store %arg6[%c0_182, %c0_183], %358 {strides = array<i32>} : memref<8x128xf32, #tpu.memory_space<vmem>>, vector<8x128xf32>,
    } else {
    }
    %c0 = arith.constant 0 : index
    %c0_1 = arith.constant 0 : index
    %3 = vector.load %arg3[%c0, %c0_1] : memref<128x512xf32, #tpu.memory_space<vmem>>, vector<128x512xf32>
    %c0_i32_2 = arith.constant 0 : i32
    %c0_3 = arith.constant 0 : index
    %c0_4 = arith.constant 0 : index
    %4 = vector.load %arg5[%c0_3, %c0_4] : memref<8x128xf32, #tpu.memory_space<vmem>>, vector<8x128xf32>
    %cst = arith.constant dense<0.000000e+00> : vector<8x512xf32>
    %5 = tpu.matmul %4, %3, %cst {dimension_numbers = #tpu.dot_dimension_numbers<[1], [0], [0], [1], [0, 0, 1, 1], [], []>} : vector<8x128xf32>, vector<128x512xf32>, vector<8x512xf32> -> vector<8x512xf32>
    %6 = arith.index_cast %c0_i32_2 : i32 to index
    %c0_5 = arith.constant 0 : index
    %c0_6 = arith.constant 0 : index
    %7 = vector.load %arg2[%6, %c0_5, %c0_6] : memref<8x8x512xf32, #tpu.memory_space<vmem>>, vector<1x8x512xf32>
    %8 = vector.shape_cast %7 : vector<1x8x512xf32> to vector<8x512xf32>
    %9 = arith.addf %5, %8 : vector<8x512xf32>
    %10 = vector.extract_strided_slice %9 {offsets = [0, 0], sizes = [8, 128], strides = [1, 1]} : vector<8x512xf32> to vector<8x128xf32>
    %cst_7 = arith.constant 5.000000e-01 : f32
    %11 = vector.broadcast %cst_7 : f32 to vector<8x128xf32>
    %12 = arith.mulf %11, %10 : vector<8x128xf32>
    %13 = math.tanh %12 : vector<8x128xf32>
    %cst_8 = arith.constant 1.000000e+00 : f32
    %14 = vector.broadcast %cst_8 : f32 to vector<8x128xf32>
    %15 = arith.addf %14, %13 : vector<8x128xf32>
    %cst_9 = arith.constant 5.000000e-01 : f32
    %16 = vector.broadcast %cst_9 : f32 to vector<8x128xf32>
    %17 = arith.mulf %16, %15 : vector<8x128xf32>
    %18 = vector.extract_strided_slice %9 {offsets = [0, 128], sizes = [8, 128], strides = [1, 1]} : vector<8x512xf32> to vector<8x128xf32>
    %cst_10 = arith.constant 5.000000e-01 : f32
    %19 = vector.broadcast %cst_10 : f32 to vector<8x128xf32>
    %20 = arith.mulf %19, %18 : vector<8x128xf32>
    %21 = math.tanh %20 : vector<8x128xf32>
    %cst_11 = arith.constant 1.000000e+00 : f32
    %22 = vector.broadcast %cst_11 : f32 to vector<8x128xf32>
    %23 = arith.addf %22, %21 : vector<8x128xf32>
    %cst_12 = arith.constant 5.000000e-01 : f32
    %24 = vector.broadcast %cst_12 : f32 to vector<8x128xf32>
    %25 = arith.mulf %24, %23 : vector<8x128xf32>
    %26 = vector.extract_strided_slice %9 {offsets = [0, 256], sizes = [8, 128], strides = [1, 1]} : vector<8x512xf32> to vector<8x128xf32>
    %27 = math.tanh %26 : vector<8x128xf32>
    %28 = vector.extract_strided_slice %9 {offsets = [0, 384], sizes = [8, 128], strides = [1, 1]} : vector<8x512xf32> to vector<8x128xf32>
    %cst_13 = arith.constant 5.000000e-01 : f32
    %29 = vector.broadcast %cst_13 : f32 to vector<8x128xf32>
    %30 = arith.mulf %29, %28 : vector<8x128xf32>
    %31 = math.tanh %30 : vector<8x128xf32>
    %cst_14 = arith.constant 1.000000e+00 : f32
    %32 = vector.broadcast %cst_14 : f32 to vector<8x128xf32>
    %33 = arith.addf %32, %31 : vector<8x128xf32>
    %cst_15 = arith.constant 5.000000e-01 : f32
    %34 = vector.broadcast %cst_15 : f32 to vector<8x128xf32>
    %35 = arith.mulf %34, %33 : vector<8x128xf32>
    %c0_16 = arith.constant 0 : index
    %c0_17 = arith.constant 0 : index
    %36 = vector.load %arg6[%c0_16, %c0_17] : memref<8x128xf32, #tpu.memory_space<vmem>>, vector<8x128xf32>
    %37 = arith.mulf %25, %36 : vector<8x128xf32>
    %38 = arith.mulf %17, %27 : vector<8x128xf32>
    %39 = arith.addf %37, %38 : vector<8x128xf32>
    %40 = math.tanh %39 : vector<8x128xf32>
    %41 = arith.mulf %35, %40 : vector<8x128xf32>
    %c0_18 = arith.constant 0 : index
    %c0_19 = arith.constant 0 : index
    %42 = vector.load %arg6[%c0_18, %c0_19] : memref<8x128xf32, #tpu.memory_space<vmem>>, vector<8x128xf32>
    tpu.vector_store %arg6[%c0_18, %c0_19], %39 {strides = array<i32>} : memref<8x128xf32, #tpu.memory_space<vmem>>, vector<8x128xf32>,
    %c0_20 = arith.constant 0 : index
    %c0_21 = arith.constant 0 : index
    %43 = vector.load %arg5[%c0_20, %c0_21] : memref<8x128xf32, #tpu.memory_space<vmem>>, vector<8x128xf32>
    tpu.vector_store %arg5[%c0_20, %c0_21], %41 {strides = array<i32>} : memref<8x128xf32, #tpu.memory_space<vmem>>, vector<8x128xf32>,
    %44 = arith.index_cast %c0_i32_2 : i32 to index
    %c0_22 = arith.constant 0 : index
    %c0_23 = arith.constant 0 : index
    %45 = vector.load %arg4[%44, %c0_22, %c0_23] : memref<8x8x128xf32, #tpu.memory_space<vmem>>, vector<1x8x128xf32>
    %46 = vector.shape_cast %45 : vector<1x8x128xf32> to vector<8x128xf32>
    %47 = vector.shape_cast %41 : vector<8x128xf32> to vector<1x8x128xf32>
    tpu.vector_store %arg4[%44, %c0_22, %c0_23], %47 {strides = array<i32>} : memref<8x8x128xf32, #tpu.memory_space<vmem>>, vector<1x8x128xf32>,
    %c1_i32 = arith.constant 1 : i32
    %c0_24 = arith.constant 0 : index
    %c0_25 = arith.constant 0 : index
    %48 = vector.load %arg5[%c0_24, %c0_25] : memref<8x128xf32, #tpu.memory_space<vmem>>, vector<8x128xf32>
    %cst_26 = arith.constant dense<0.000000e+00> : vector<8x512xf32>
    %49 = tpu.matmul %48, %3, %cst_26 {dimension_numbers = #tpu.dot_dimension_numbers<[1], [0], [0], [1], [0, 0, 1, 1], [], []>} : vector<8x128xf32>, vector<128x512xf32>, vector<8x512xf32> -> vector<8x512xf32>
    %50 = arith.index_cast %c1_i32 : i32 to index
    %c0_27 = arith.constant 0 : index
    %c0_28 = arith.constant 0 : index
    %51 = vector.load %arg2[%50, %c0_27, %c0_28] : memref<8x8x512xf32, #tpu.memory_space<vmem>>, vector<1x8x512xf32>
    %52 = vector.shape_cast %51 : vector<1x8x512xf32> to vector<8x512xf32>
    %53 = arith.addf %49, %52 : vector<8x512xf32>
    %54 = vector.extract_strided_slice %53 {offsets = [0, 0], sizes = [8, 128], strides = [1, 1]} : vector<8x512xf32> to vector<8x128xf32>
    %cst_29 = arith.constant 5.000000e-01 : f32
    %55 = vector.broadcast %cst_29 : f32 to vector<8x128xf32>
    %56 = arith.mulf %55, %54 : vector<8x128xf32>
    %57 = math.tanh %56 : vector<8x128xf32>
    %cst_30 = arith.constant 1.000000e+00 : f32
    %58 = vector.broadcast %cst_30 : f32 to vector<8x128xf32>
    %59 = arith.addf %58, %57 : vector<8x128xf32>
    %cst_31 = arith.constant 5.000000e-01 : f32
    %60 = vector.broadcast %cst_31 : f32 to vector<8x128xf32>
    %61 = arith.mulf %60, %59 : vector<8x128xf32>
    %62 = vector.extract_strided_slice %53 {offsets = [0, 128], sizes = [8, 128], strides = [1, 1]} : vector<8x512xf32> to vector<8x128xf32>
    %cst_32 = arith.constant 5.000000e-01 : f32
    %63 = vector.broadcast %cst_32 : f32 to vector<8x128xf32>
    %64 = arith.mulf %63, %62 : vector<8x128xf32>
    %65 = math.tanh %64 : vector<8x128xf32>
    %cst_33 = arith.constant 1.000000e+00 : f32
    %66 = vector.broadcast %cst_33 : f32 to vector<8x128xf32>
    %67 = arith.addf %66, %65 : vector<8x128xf32>
    %cst_34 = arith.constant 5.000000e-01 : f32
    %68 = vector.broadcast %cst_34 : f32 to vector<8x128xf32>
    %69 = arith.mulf %68, %67 : vector<8x128xf32>
    %70 = vector.extract_strided_slice %53 {offsets = [0, 256], sizes = [8, 128], strides = [1, 1]} : vector<8x512xf32> to vector<8x128xf32>
    %71 = math.tanh %70 : vector<8x128xf32>
    %72 = vector.extract_strided_slice %53 {offsets = [0, 384], sizes = [8, 128], strides = [1, 1]} : vector<8x512xf32> to vector<8x128xf32>
    %cst_35 = arith.constant 5.000000e-01 : f32
    %73 = vector.broadcast %cst_35 : f32 to vector<8x128xf32>
    %74 = arith.mulf %73, %72 : vector<8x128xf32>
    %75 = math.tanh %74 : vector<8x128xf32>
    %cst_36 = arith.constant 1.000000e+00 : f32
    %76 = vector.broadcast %cst_36 : f32 to vector<8x128xf32>
    %77 = arith.addf %76, %75 : vector<8x128xf32>
    %cst_37 = arith.constant 5.000000e-01 : f32
    %78 = vector.broadcast %cst_37 : f32 to vector<8x128xf32>
    %79 = arith.mulf %78, %77 : vector<8x128xf32>
    %c0_38 = arith.constant 0 : index
    %c0_39 = arith.constant 0 : index
    %80 = vector.load %arg6[%c0_38, %c0_39] : memref<8x128xf32, #tpu.memory_space<vmem>>, vector<8x128xf32>
    %81 = arith.mulf %69, %80 : vector<8x128xf32>
    %82 = arith.mulf %61, %71 : vector<8x128xf32>
    %83 = arith.addf %81, %82 : vector<8x128xf32>
    %84 = math.tanh %83 : vector<8x128xf32>
    %85 = arith.mulf %79, %84 : vector<8x128xf32>
    %c0_40 = arith.constant 0 : index
    %c0_41 = arith.constant 0 : index
    %86 = vector.load %arg6[%c0_40, %c0_41] : memref<8x128xf32, #tpu.memory_space<vmem>>, vector<8x128xf32>
    tpu.vector_store %arg6[%c0_40, %c0_41], %83 {strides = array<i32>} : memref<8x128xf32, #tpu.memory_space<vmem>>, vector<8x128xf32>,
    %c0_42 = arith.constant 0 : index
    %c0_43 = arith.constant 0 : index
    %87 = vector.load %arg5[%c0_42, %c0_43] : memref<8x128xf32, #tpu.memory_space<vmem>>, vector<8x128xf32>
    tpu.vector_store %arg5[%c0_42, %c0_43], %85 {strides = array<i32>} : memref<8x128xf32, #tpu.memory_space<vmem>>, vector<8x128xf32>,
    %88 = arith.index_cast %c1_i32 : i32 to index
    %c0_44 = arith.constant 0 : index
    %c0_45 = arith.constant 0 : index
    %89 = vector.load %arg4[%88, %c0_44, %c0_45] : memref<8x8x128xf32, #tpu.memory_space<vmem>>, vector<1x8x128xf32>
    %90 = vector.shape_cast %89 : vector<1x8x128xf32> to vector<8x128xf32>
    %91 = vector.shape_cast %85 : vector<8x128xf32> to vector<1x8x128xf32>
    tpu.vector_store %arg4[%88, %c0_44, %c0_45], %91 {strides = array<i32>} : memref<8x8x128xf32, #tpu.memory_space<vmem>>, vector<1x8x128xf32>,
    %c2_i32 = arith.constant 2 : i32
    %c0_46 = arith.constant 0 : index
    %c0_47 = arith.constant 0 : index
    %92 = vector.load %arg5[%c0_46, %c0_47] : memref<8x128xf32, #tpu.memory_space<vmem>>, vector<8x128xf32>
    %cst_48 = arith.constant dense<0.000000e+00> : vector<8x512xf32>
    %93 = tpu.matmul %92, %3, %cst_48 {dimension_numbers = #tpu.dot_dimension_numbers<[1], [0], [0], [1], [0, 0, 1, 1], [], []>} : vector<8x128xf32>, vector<128x512xf32>, vector<8x512xf32> -> vector<8x512xf32>
    %94 = arith.index_cast %c2_i32 : i32 to index
    %c0_49 = arith.constant 0 : index
    %c0_50 = arith.constant 0 : index
    %95 = vector.load %arg2[%94, %c0_49, %c0_50] : memref<8x8x512xf32, #tpu.memory_space<vmem>>, vector<1x8x512xf32>
    %96 = vector.shape_cast %95 : vector<1x8x512xf32> to vector<8x512xf32>
    %97 = arith.addf %93, %96 : vector<8x512xf32>
    %98 = vector.extract_strided_slice %97 {offsets = [0, 0], sizes = [8, 128], strides = [1, 1]} : vector<8x512xf32> to vector<8x128xf32>
    %cst_51 = arith.constant 5.000000e-01 : f32
    %99 = vector.broadcast %cst_51 : f32 to vector<8x128xf32>
    %100 = arith.mulf %99, %98 : vector<8x128xf32>
    %101 = math.tanh %100 : vector<8x128xf32>
    %cst_52 = arith.constant 1.000000e+00 : f32
    %102 = vector.broadcast %cst_52 : f32 to vector<8x128xf32>
    %103 = arith.addf %102, %101 : vector<8x128xf32>
    %cst_53 = arith.constant 5.000000e-01 : f32
    %104 = vector.broadcast %cst_53 : f32 to vector<8x128xf32>
    %105 = arith.mulf %104, %103 : vector<8x128xf32>
    %106 = vector.extract_strided_slice %97 {offsets = [0, 128], sizes = [8, 128], strides = [1, 1]} : vector<8x512xf32> to vector<8x128xf32>
    %cst_54 = arith.constant 5.000000e-01 : f32
    %107 = vector.broadcast %cst_54 : f32 to vector<8x128xf32>
    %108 = arith.mulf %107, %106 : vector<8x128xf32>
    %109 = math.tanh %108 : vector<8x128xf32>
    %cst_55 = arith.constant 1.000000e+00 : f32
    %110 = vector.broadcast %cst_55 : f32 to vector<8x128xf32>
    %111 = arith.addf %110, %109 : vector<8x128xf32>
    %cst_56 = arith.constant 5.000000e-01 : f32
    %112 = vector.broadcast %cst_56 : f32 to vector<8x128xf32>
    %113 = arith.mulf %112, %111 : vector<8x128xf32>
    %114 = vector.extract_strided_slice %97 {offsets = [0, 256], sizes = [8, 128], strides = [1, 1]} : vector<8x512xf32> to vector<8x128xf32>
    %115 = math.tanh %114 : vector<8x128xf32>
    %116 = vector.extract_strided_slice %97 {offsets = [0, 384], sizes = [8, 128], strides = [1, 1]} : vector<8x512xf32> to vector<8x128xf32>
    %cst_57 = arith.constant 5.000000e-01 : f32
    %117 = vector.broadcast %cst_57 : f32 to vector<8x128xf32>
    %118 = arith.mulf %117, %116 : vector<8x128xf32>
    %119 = math.tanh %118 : vector<8x128xf32>
    %cst_58 = arith.constant 1.000000e+00 : f32
    %120 = vector.broadcast %cst_58 : f32 to vector<8x128xf32>
    %121 = arith.addf %120, %119 : vector<8x128xf32>
    %cst_59 = arith.constant 5.000000e-01 : f32
    %122 = vector.broadcast %cst_59 : f32 to vector<8x128xf32>
    %123 = arith.mulf %122, %121 : vector<8x128xf32>
    %c0_60 = arith.constant 0 : index
    %c0_61 = arith.constant 0 : index
    %124 = vector.load %arg6[%c0_60, %c0_61] : memref<8x128xf32, #tpu.memory_space<vmem>>, vector<8x128xf32>
    %125 = arith.mulf %113, %124 : vector<8x128xf32>
    %126 = arith.mulf %105, %115 : vector<8x128xf32>
    %127 = arith.addf %125, %126 : vector<8x128xf32>
    %128 = math.tanh %127 : vector<8x128xf32>
    %129 = arith.mulf %123, %128 : vector<8x128xf32>
    %c0_62 = arith.constant 0 : index
    %c0_63 = arith.constant 0 : index
    %130 = vector.load %arg6[%c0_62, %c0_63] : memref<8x128xf32, #tpu.memory_space<vmem>>, vector<8x128xf32>
    tpu.vector_store %arg6[%c0_62, %c0_63], %127 {strides = array<i32>} : memref<8x128xf32, #tpu.memory_space<vmem>>, vector<8x128xf32>,
    %c0_64 = arith.constant 0 : index
    %c0_65 = arith.constant 0 : index
    %131 = vector.load %arg5[%c0_64, %c0_65] : memref<8x128xf32, #tpu.memory_space<vmem>>, vector<8x128xf32>
    tpu.vector_store %arg5[%c0_64, %c0_65], %129 {strides = array<i32>} : memref<8x128xf32, #tpu.memory_space<vmem>>, vector<8x128xf32>,
    %132 = arith.index_cast %c2_i32 : i32 to index
    %c0_66 = arith.constant 0 : index
    %c0_67 = arith.constant 0 : index
    %133 = vector.load %arg4[%132, %c0_66, %c0_67] : memref<8x8x128xf32, #tpu.memory_space<vmem>>, vector<1x8x128xf32>
    %134 = vector.shape_cast %133 : vector<1x8x128xf32> to vector<8x128xf32>
    %135 = vector.shape_cast %129 : vector<8x128xf32> to vector<1x8x128xf32>
    tpu.vector_store %arg4[%132, %c0_66, %c0_67], %135 {strides = array<i32>} : memref<8x8x128xf32, #tpu.memory_space<vmem>>, vector<1x8x128xf32>,
    %c3_i32 = arith.constant 3 : i32
    %c0_68 = arith.constant 0 : index
    %c0_69 = arith.constant 0 : index
    %136 = vector.load %arg5[%c0_68, %c0_69] : memref<8x128xf32, #tpu.memory_space<vmem>>, vector<8x128xf32>
    %cst_70 = arith.constant dense<0.000000e+00> : vector<8x512xf32>
    %137 = tpu.matmul %136, %3, %cst_70 {dimension_numbers = #tpu.dot_dimension_numbers<[1], [0], [0], [1], [0, 0, 1, 1], [], []>} : vector<8x128xf32>, vector<128x512xf32>, vector<8x512xf32> -> vector<8x512xf32>
    %138 = arith.index_cast %c3_i32 : i32 to index
    %c0_71 = arith.constant 0 : index
    %c0_72 = arith.constant 0 : index
    %139 = vector.load %arg2[%138, %c0_71, %c0_72] : memref<8x8x512xf32, #tpu.memory_space<vmem>>, vector<1x8x512xf32>
    %140 = vector.shape_cast %139 : vector<1x8x512xf32> to vector<8x512xf32>
    %141 = arith.addf %137, %140 : vector<8x512xf32>
    %142 = vector.extract_strided_slice %141 {offsets = [0, 0], sizes = [8, 128], strides = [1, 1]} : vector<8x512xf32> to vector<8x128xf32>
    %cst_73 = arith.constant 5.000000e-01 : f32
    %143 = vector.broadcast %cst_73 : f32 to vector<8x128xf32>
    %144 = arith.mulf %143, %142 : vector<8x128xf32>
    %145 = math.tanh %144 : vector<8x128xf32>
    %cst_74 = arith.constant 1.000000e+00 : f32
    %146 = vector.broadcast %cst_74 : f32 to vector<8x128xf32>
    %147 = arith.addf %146, %145 : vector<8x128xf32>
    %cst_75 = arith.constant 5.000000e-01 : f32
    %148 = vector.broadcast %cst_75 : f32 to vector<8x128xf32>
    %149 = arith.mulf %148, %147 : vector<8x128xf32>
    %150 = vector.extract_strided_slice %141 {offsets = [0, 128], sizes = [8, 128], strides = [1, 1]} : vector<8x512xf32> to vector<8x128xf32>
    %cst_76 = arith.constant 5.000000e-01 : f32
    %151 = vector.broadcast %cst_76 : f32 to vector<8x128xf32>
    %152 = arith.mulf %151, %150 : vector<8x128xf32>
    %153 = math.tanh %152 : vector<8x128xf32>
    %cst_77 = arith.constant 1.000000e+00 : f32
    %154 = vector.broadcast %cst_77 : f32 to vector<8x128xf32>
    %155 = arith.addf %154, %153 : vector<8x128xf32>
    %cst_78 = arith.constant 5.000000e-01 : f32
    %156 = vector.broadcast %cst_78 : f32 to vector<8x128xf32>
    %157 = arith.mulf %156, %155 : vector<8x128xf32>
    %158 = vector.extract_strided_slice %141 {offsets = [0, 256], sizes = [8, 128], strides = [1, 1]} : vector<8x512xf32> to vector<8x128xf32>
    %159 = math.tanh %158 : vector<8x128xf32>
    %160 = vector.extract_strided_slice %141 {offsets = [0, 384], sizes = [8, 128], strides = [1, 1]} : vector<8x512xf32> to vector<8x128xf32>
    %cst_79 = arith.constant 5.000000e-01 : f32
    %161 = vector.broadcast %cst_79 : f32 to vector<8x128xf32>
    %162 = arith.mulf %161, %160 : vector<8x128xf32>
    %163 = math.tanh %162 : vector<8x128xf32>
    %cst_80 = arith.constant 1.000000e+00 : f32
    %164 = vector.broadcast %cst_80 : f32 to vector<8x128xf32>
    %165 = arith.addf %164, %163 : vector<8x128xf32>
    %cst_81 = arith.constant 5.000000e-01 : f32
    %166 = vector.broadcast %cst_81 : f32 to vector<8x128xf32>
    %167 = arith.mulf %166, %165 : vector<8x128xf32>
    %c0_82 = arith.constant 0 : index
    %c0_83 = arith.constant 0 : index
    %168 = vector.load %arg6[%c0_82, %c0_83] : memref<8x128xf32, #tpu.memory_space<vmem>>, vector<8x128xf32>
    %169 = arith.mulf %157, %168 : vector<8x128xf32>
    %170 = arith.mulf %149, %159 : vector<8x128xf32>
    %171 = arith.addf %169, %170 : vector<8x128xf32>
    %172 = math.tanh %171 : vector<8x128xf32>
    %173 = arith.mulf %167, %172 : vector<8x128xf32>
    %c0_84 = arith.constant 0 : index
    %c0_85 = arith.constant 0 : index
    %174 = vector.load %arg6[%c0_84, %c0_85] : memref<8x128xf32, #tpu.memory_space<vmem>>, vector<8x128xf32>
    tpu.vector_store %arg6[%c0_84, %c0_85], %171 {strides = array<i32>} : memref<8x128xf32, #tpu.memory_space<vmem>>, vector<8x128xf32>,
    %c0_86 = arith.constant 0 : index
    %c0_87 = arith.constant 0 : index
    %175 = vector.load %arg5[%c0_86, %c0_87] : memref<8x128xf32, #tpu.memory_space<vmem>>, vector<8x128xf32>
    tpu.vector_store %arg5[%c0_86, %c0_87], %173 {strides = array<i32>} : memref<8x128xf32, #tpu.memory_space<vmem>>, vector<8x128xf32>,
    %176 = arith.index_cast %c3_i32 : i32 to index
    %c0_88 = arith.constant 0 : index
    %c0_89 = arith.constant 0 : index
    %177 = vector.load %arg4[%176, %c0_88, %c0_89] : memref<8x8x128xf32, #tpu.memory_space<vmem>>, vector<1x8x128xf32>
    %178 = vector.shape_cast %177 : vector<1x8x128xf32> to vector<8x128xf32>
    %179 = vector.shape_cast %173 : vector<8x128xf32> to vector<1x8x128xf32>
    tpu.vector_store %arg4[%176, %c0_88, %c0_89], %179 {strides = array<i32>} : memref<8x8x128xf32, #tpu.memory_space<vmem>>, vector<1x8x128xf32>,
    %c4_i32 = arith.constant 4 : i32
    %c0_90 = arith.constant 0 : index
    %c0_91 = arith.constant 0 : index
    %180 = vector.load %arg5[%c0_90, %c0_91] : memref<8x128xf32, #tpu.memory_space<vmem>>, vector<8x128xf32>
    %cst_92 = arith.constant dense<0.000000e+00> : vector<8x512xf32>
    %181 = tpu.matmul %180, %3, %cst_92 {dimension_numbers = #tpu.dot_dimension_numbers<[1], [0], [0], [1], [0, 0, 1, 1], [], []>} : vector<8x128xf32>, vector<128x512xf32>, vector<8x512xf32> -> vector<8x512xf32>
    %182 = arith.index_cast %c4_i32 : i32 to index
    %c0_93 = arith.constant 0 : index
    %c0_94 = arith.constant 0 : index
    %183 = vector.load %arg2[%182, %c0_93, %c0_94] : memref<8x8x512xf32, #tpu.memory_space<vmem>>, vector<1x8x512xf32>
    %184 = vector.shape_cast %183 : vector<1x8x512xf32> to vector<8x512xf32>
    %185 = arith.addf %181, %184 : vector<8x512xf32>
    %186 = vector.extract_strided_slice %185 {offsets = [0, 0], sizes = [8, 128], strides = [1, 1]} : vector<8x512xf32> to vector<8x128xf32>
    %cst_95 = arith.constant 5.000000e-01 : f32
    %187 = vector.broadcast %cst_95 : f32 to vector<8x128xf32>
    %188 = arith.mulf %187, %186 : vector<8x128xf32>
    %189 = math.tanh %188 : vector<8x128xf32>
    %cst_96 = arith.constant 1.000000e+00 : f32
    %190 = vector.broadcast %cst_96 : f32 to vector<8x128xf32>
    %191 = arith.addf %190, %189 : vector<8x128xf32>
    %cst_97 = arith.constant 5.000000e-01 : f32
    %192 = vector.broadcast %cst_97 : f32 to vector<8x128xf32>
    %193 = arith.mulf %192, %191 : vector<8x128xf32>
    %194 = vector.extract_strided_slice %185 {offsets = [0, 128], sizes = [8, 128], strides = [1, 1]} : vector<8x512xf32> to vector<8x128xf32>
    %cst_98 = arith.constant 5.000000e-01 : f32
    %195 = vector.broadcast %cst_98 : f32 to vector<8x128xf32>
    %196 = arith.mulf %195, %194 : vector<8x128xf32>
    %197 = math.tanh %196 : vector<8x128xf32>
    %cst_99 = arith.constant 1.000000e+00 : f32
    %198 = vector.broadcast %cst_99 : f32 to vector<8x128xf32>
    %199 = arith.addf %198, %197 : vector<8x128xf32>
    %cst_100 = arith.constant 5.000000e-01 : f32
    %200 = vector.broadcast %cst_100 : f32 to vector<8x128xf32>
    %201 = arith.mulf %200, %199 : vector<8x128xf32>
    %202 = vector.extract_strided_slice %185 {offsets = [0, 256], sizes = [8, 128], strides = [1, 1]} : vector<8x512xf32> to vector<8x128xf32>
    %203 = math.tanh %202 : vector<8x128xf32>
    %204 = vector.extract_strided_slice %185 {offsets = [0, 384], sizes = [8, 128], strides = [1, 1]} : vector<8x512xf32> to vector<8x128xf32>
    %cst_101 = arith.constant 5.000000e-01 : f32
    %205 = vector.broadcast %cst_101 : f32 to vector<8x128xf32>
    %206 = arith.mulf %205, %204 : vector<8x128xf32>
    %207 = math.tanh %206 : vector<8x128xf32>
    %cst_102 = arith.constant 1.000000e+00 : f32
    %208 = vector.broadcast %cst_102 : f32 to vector<8x128xf32>
    %209 = arith.addf %208, %207 : vector<8x128xf32>
    %cst_103 = arith.constant 5.000000e-01 : f32
    %210 = vector.broadcast %cst_103 : f32 to vector<8x128xf32>
    %211 = arith.mulf %210, %209 : vector<8x128xf32>
    %c0_104 = arith.constant 0 : index
    %c0_105 = arith.constant 0 : index
    %212 = vector.load %arg6[%c0_104, %c0_105] : memref<8x128xf32, #tpu.memory_space<vmem>>, vector<8x128xf32>
    %213 = arith.mulf %201, %212 : vector<8x128xf32>
    %214 = arith.mulf %193, %203 : vector<8x128xf32>
    %215 = arith.addf %213, %214 : vector<8x128xf32>
    %216 = math.tanh %215 : vector<8x128xf32>
    %217 = arith.mulf %211, %216 : vector<8x128xf32>
    %c0_106 = arith.constant 0 : index
    %c0_107 = arith.constant 0 : index
    %218 = vector.load %arg6[%c0_106, %c0_107] : memref<8x128xf32, #tpu.memory_space<vmem>>, vector<8x128xf32>
    tpu.vector_store %arg6[%c0_106, %c0_107], %215 {strides = array<i32>} : memref<8x128xf32, #tpu.memory_space<vmem>>, vector<8x128xf32>,
    %c0_108 = arith.constant 0 : index
    %c0_109 = arith.constant 0 : index
    %219 = vector.load %arg5[%c0_108, %c0_109] : memref<8x128xf32, #tpu.memory_space<vmem>>, vector<8x128xf32>
    tpu.vector_store %arg5[%c0_108, %c0_109], %217 {strides = array<i32>} : memref<8x128xf32, #tpu.memory_space<vmem>>, vector<8x128xf32>,
    %220 = arith.index_cast %c4_i32 : i32 to index
    %c0_110 = arith.constant 0 : index
    %c0_111 = arith.constant 0 : index
    %221 = vector.load %arg4[%220, %c0_110, %c0_111] : memref<8x8x128xf32, #tpu.memory_space<vmem>>, vector<1x8x128xf32>
    %222 = vector.shape_cast %221 : vector<1x8x128xf32> to vector<8x128xf32>
    %223 = vector.shape_cast %217 : vector<8x128xf32> to vector<1x8x128xf32>
    tpu.vector_store %arg4[%220, %c0_110, %c0_111], %223 {strides = array<i32>} : memref<8x8x128xf32, #tpu.memory_space<vmem>>, vector<1x8x128xf32>,
    %c5_i32 = arith.constant 5 : i32
    %c0_112 = arith.constant 0 : index
    %c0_113 = arith.constant 0 : index
    %224 = vector.load %arg5[%c0_112, %c0_113] : memref<8x128xf32, #tpu.memory_space<vmem>>, vector<8x128xf32>
    %cst_114 = arith.constant dense<0.000000e+00> : vector<8x512xf32>
    %225 = tpu.matmul %224, %3, %cst_114 {dimension_numbers = #tpu.dot_dimension_numbers<[1], [0], [0], [1], [0, 0, 1, 1], [], []>} : vector<8x128xf32>, vector<128x512xf32>, vector<8x512xf32> -> vector<8x512xf32>
    %226 = arith.index_cast %c5_i32 : i32 to index
    %c0_115 = arith.constant 0 : index
    %c0_116 = arith.constant 0 : index
    %227 = vector.load %arg2[%226, %c0_115, %c0_116] : memref<8x8x512xf32, #tpu.memory_space<vmem>>, vector<1x8x512xf32>
    %228 = vector.shape_cast %227 : vector<1x8x512xf32> to vector<8x512xf32>
    %229 = arith.addf %225, %228 : vector<8x512xf32>
    %230 = vector.extract_strided_slice %229 {offsets = [0, 0], sizes = [8, 128], strides = [1, 1]} : vector<8x512xf32> to vector<8x128xf32>
    %cst_117 = arith.constant 5.000000e-01 : f32
    %231 = vector.broadcast %cst_117 : f32 to vector<8x128xf32>
    %232 = arith.mulf %231, %230 : vector<8x128xf32>
    %233 = math.tanh %232 : vector<8x128xf32>
    %cst_118 = arith.constant 1.000000e+00 : f32
    %234 = vector.broadcast %cst_118 : f32 to vector<8x128xf32>
    %235 = arith.addf %234, %233 : vector<8x128xf32>
    %cst_119 = arith.constant 5.000000e-01 : f32
    %236 = vector.broadcast %cst_119 : f32 to vector<8x128xf32>
    %237 = arith.mulf %236, %235 : vector<8x128xf32>
    %238 = vector.extract_strided_slice %229 {offsets = [0, 128], sizes = [8, 128], strides = [1, 1]} : vector<8x512xf32> to vector<8x128xf32>
    %cst_120 = arith.constant 5.000000e-01 : f32
    %239 = vector.broadcast %cst_120 : f32 to vector<8x128xf32>
    %240 = arith.mulf %239, %238 : vector<8x128xf32>
    %241 = math.tanh %240 : vector<8x128xf32>
    %cst_121 = arith.constant 1.000000e+00 : f32
    %242 = vector.broadcast %cst_121 : f32 to vector<8x128xf32>
    %243 = arith.addf %242, %241 : vector<8x128xf32>
    %cst_122 = arith.constant 5.000000e-01 : f32
    %244 = vector.broadcast %cst_122 : f32 to vector<8x128xf32>
    %245 = arith.mulf %244, %243 : vector<8x128xf32>
    %246 = vector.extract_strided_slice %229 {offsets = [0, 256], sizes = [8, 128], strides = [1, 1]} : vector<8x512xf32> to vector<8x128xf32>
    %247 = math.tanh %246 : vector<8x128xf32>
    %248 = vector.extract_strided_slice %229 {offsets = [0, 384], sizes = [8, 128], strides = [1, 1]} : vector<8x512xf32> to vector<8x128xf32>
    %cst_123 = arith.constant 5.000000e-01 : f32
    %249 = vector.broadcast %cst_123 : f32 to vector<8x128xf32>
    %250 = arith.mulf %249, %248 : vector<8x128xf32>
    %251 = math.tanh %250 : vector<8x128xf32>
    %cst_124 = arith.constant 1.000000e+00 : f32
    %252 = vector.broadcast %cst_124 : f32 to vector<8x128xf32>
    %253 = arith.addf %252, %251 : vector<8x128xf32>
    %cst_125 = arith.constant 5.000000e-01 : f32
    %254 = vector.broadcast %cst_125 : f32 to vector<8x128xf32>
    %255 = arith.mulf %254, %253 : vector<8x128xf32>
    %c0_126 = arith.constant 0 : index
    %c0_127 = arith.constant 0 : index
    %256 = vector.load %arg6[%c0_126, %c0_127] : memref<8x128xf32, #tpu.memory_space<vmem>>, vector<8x128xf32>
    %257 = arith.mulf %245, %256 : vector<8x128xf32>
    %258 = arith.mulf %237, %247 : vector<8x128xf32>
    %259 = arith.addf %257, %258 : vector<8x128xf32>
    %260 = math.tanh %259 : vector<8x128xf32>
    %261 = arith.mulf %255, %260 : vector<8x128xf32>
    %c0_128 = arith.constant 0 : index
    %c0_129 = arith.constant 0 : index
    %262 = vector.load %arg6[%c0_128, %c0_129] : memref<8x128xf32, #tpu.memory_space<vmem>>, vector<8x128xf32>
    tpu.vector_store %arg6[%c0_128, %c0_129], %259 {strides = array<i32>} : memref<8x128xf32, #tpu.memory_space<vmem>>, vector<8x128xf32>,
    %c0_130 = arith.constant 0 : index
    %c0_131 = arith.constant 0 : index
    %263 = vector.load %arg5[%c0_130, %c0_131] : memref<8x128xf32, #tpu.memory_space<vmem>>, vector<8x128xf32>
    tpu.vector_store %arg5[%c0_130, %c0_131], %261 {strides = array<i32>} : memref<8x128xf32, #tpu.memory_space<vmem>>, vector<8x128xf32>,
    %264 = arith.index_cast %c5_i32 : i32 to index
    %c0_132 = arith.constant 0 : index
    %c0_133 = arith.constant 0 : index
    %265 = vector.load %arg4[%264, %c0_132, %c0_133] : memref<8x8x128xf32, #tpu.memory_space<vmem>>, vector<1x8x128xf32>
    %266 = vector.shape_cast %265 : vector<1x8x128xf32> to vector<8x128xf32>
    %267 = vector.shape_cast %261 : vector<8x128xf32> to vector<1x8x128xf32>
    tpu.vector_store %arg4[%264, %c0_132, %c0_133], %267 {strides = array<i32>} : memref<8x8x128xf32, #tpu.memory_space<vmem>>, vector<1x8x128xf32>,
    %c6_i32 = arith.constant 6 : i32
    %c0_134 = arith.constant 0 : index
    %c0_135 = arith.constant 0 : index
    %268 = vector.load %arg5[%c0_134, %c0_135] : memref<8x128xf32, #tpu.memory_space<vmem>>, vector<8x128xf32>
    %cst_136 = arith.constant dense<0.000000e+00> : vector<8x512xf32>
    %269 = tpu.matmul %268, %3, %cst_136 {dimension_numbers = #tpu.dot_dimension_numbers<[1], [0], [0], [1], [0, 0, 1, 1], [], []>} : vector<8x128xf32>, vector<128x512xf32>, vector<8x512xf32> -> vector<8x512xf32>
    %270 = arith.index_cast %c6_i32 : i32 to index
    %c0_137 = arith.constant 0 : index
    %c0_138 = arith.constant 0 : index
    %271 = vector.load %arg2[%270, %c0_137, %c0_138] : memref<8x8x512xf32, #tpu.memory_space<vmem>>, vector<1x8x512xf32>
    %272 = vector.shape_cast %271 : vector<1x8x512xf32> to vector<8x512xf32>
    %273 = arith.addf %269, %272 : vector<8x512xf32>
    %274 = vector.extract_strided_slice %273 {offsets = [0, 0], sizes = [8, 128], strides = [1, 1]} : vector<8x512xf32> to vector<8x128xf32>
    %cst_139 = arith.constant 5.000000e-01 : f32
    %275 = vector.broadcast %cst_139 : f32 to vector<8x128xf32>
    %276 = arith.mulf %275, %274 : vector<8x128xf32>
    %277 = math.tanh %276 : vector<8x128xf32>
    %cst_140 = arith.constant 1.000000e+00 : f32
    %278 = vector.broadcast %cst_140 : f32 to vector<8x128xf32>
    %279 = arith.addf %278, %277 : vector<8x128xf32>
    %cst_141 = arith.constant 5.000000e-01 : f32
    %280 = vector.broadcast %cst_141 : f32 to vector<8x128xf32>
    %281 = arith.mulf %280, %279 : vector<8x128xf32>
    %282 = vector.extract_strided_slice %273 {offsets = [0, 128], sizes = [8, 128], strides = [1, 1]} : vector<8x512xf32> to vector<8x128xf32>
    %cst_142 = arith.constant 5.000000e-01 : f32
    %283 = vector.broadcast %cst_142 : f32 to vector<8x128xf32>
    %284 = arith.mulf %283, %282 : vector<8x128xf32>
    %285 = math.tanh %284 : vector<8x128xf32>
    %cst_143 = arith.constant 1.000000e+00 : f32
    %286 = vector.broadcast %cst_143 : f32 to vector<8x128xf32>
    %287 = arith.addf %286, %285 : vector<8x128xf32>
    %cst_144 = arith.constant 5.000000e-01 : f32
    %288 = vector.broadcast %cst_144 : f32 to vector<8x128xf32>
    %289 = arith.mulf %288, %287 : vector<8x128xf32>
    %290 = vector.extract_strided_slice %273 {offsets = [0, 256], sizes = [8, 128], strides = [1, 1]} : vector<8x512xf32> to vector<8x128xf32>
    %291 = math.tanh %290 : vector<8x128xf32>
    %292 = vector.extract_strided_slice %273 {offsets = [0, 384], sizes = [8, 128], strides = [1, 1]} : vector<8x512xf32> to vector<8x128xf32>
    %cst_145 = arith.constant 5.000000e-01 : f32
    %293 = vector.broadcast %cst_145 : f32 to vector<8x128xf32>
    %294 = arith.mulf %293, %292 : vector<8x128xf32>
    %295 = math.tanh %294 : vector<8x128xf32>
    %cst_146 = arith.constant 1.000000e+00 : f32
    %296 = vector.broadcast %cst_146 : f32 to vector<8x128xf32>
    %297 = arith.addf %296, %295 : vector<8x128xf32>
    %cst_147 = arith.constant 5.000000e-01 : f32
    %298 = vector.broadcast %cst_147 : f32 to vector<8x128xf32>
    %299 = arith.mulf %298, %297 : vector<8x128xf32>
    %c0_148 = arith.constant 0 : index
    %c0_149 = arith.constant 0 : index
    %300 = vector.load %arg6[%c0_148, %c0_149] : memref<8x128xf32, #tpu.memory_space<vmem>>, vector<8x128xf32>
    %301 = arith.mulf %289, %300 : vector<8x128xf32>
    %302 = arith.mulf %281, %291 : vector<8x128xf32>
    %303 = arith.addf %301, %302 : vector<8x128xf32>
    %304 = math.tanh %303 : vector<8x128xf32>
    %305 = arith.mulf %299, %304 : vector<8x128xf32>
    %c0_150 = arith.constant 0 : index
    %c0_151 = arith.constant 0 : index
    %306 = vector.load %arg6[%c0_150, %c0_151] : memref<8x128xf32, #tpu.memory_space<vmem>>, vector<8x128xf32>
    tpu.vector_store %arg6[%c0_150, %c0_151], %303 {strides = array<i32>} : memref<8x128xf32, #tpu.memory_space<vmem>>, vector<8x128xf32>,
    %c0_152 = arith.constant 0 : index
    %c0_153 = arith.constant 0 : index
    %307 = vector.load %arg5[%c0_152, %c0_153] : memref<8x128xf32, #tpu.memory_space<vmem>>, vector<8x128xf32>
    tpu.vector_store %arg5[%c0_152, %c0_153], %305 {strides = array<i32>} : memref<8x128xf32, #tpu.memory_space<vmem>>, vector<8x128xf32>,
    %308 = arith.index_cast %c6_i32 : i32 to index
    %c0_154 = arith.constant 0 : index
    %c0_155 = arith.constant 0 : index
    %309 = vector.load %arg4[%308, %c0_154, %c0_155] : memref<8x8x128xf32, #tpu.memory_space<vmem>>, vector<1x8x128xf32>
    %310 = vector.shape_cast %309 : vector<1x8x128xf32> to vector<8x128xf32>
    %311 = vector.shape_cast %305 : vector<8x128xf32> to vector<1x8x128xf32>
    tpu.vector_store %arg4[%308, %c0_154, %c0_155], %311 {strides = array<i32>} : memref<8x8x128xf32, #tpu.memory_space<vmem>>, vector<1x8x128xf32>,
    %c7_i32 = arith.constant 7 : i32
    %c0_156 = arith.constant 0 : index
    %c0_157 = arith.constant 0 : index
    %312 = vector.load %arg5[%c0_156, %c0_157] : memref<8x128xf32, #tpu.memory_space<vmem>>, vector<8x128xf32>
    %cst_158 = arith.constant dense<0.000000e+00> : vector<8x512xf32>
    %313 = tpu.matmul %312, %3, %cst_158 {dimension_numbers = #tpu.dot_dimension_numbers<[1], [0], [0], [1], [0, 0, 1, 1], [], []>} : vector<8x128xf32>, vector<128x512xf32>, vector<8x512xf32> -> vector<8x512xf32>
    %314 = arith.index_cast %c7_i32 : i32 to index
    %c0_159 = arith.constant 0 : index
    %c0_160 = arith.constant 0 : index
    %315 = vector.load %arg2[%314, %c0_159, %c0_160] : memref<8x8x512xf32, #tpu.memory_space<vmem>>, vector<1x8x512xf32>
    %316 = vector.shape_cast %315 : vector<1x8x512xf32> to vector<8x512xf32>
    %317 = arith.addf %313, %316 : vector<8x512xf32>
    %318 = vector.extract_strided_slice %317 {offsets = [0, 0], sizes = [8, 128], strides = [1, 1]} : vector<8x512xf32> to vector<8x128xf32>
    %cst_161 = arith.constant 5.000000e-01 : f32
    %319 = vector.broadcast %cst_161 : f32 to vector<8x128xf32>
    %320 = arith.mulf %319, %318 : vector<8x128xf32>
    %321 = math.tanh %320 : vector<8x128xf32>
    %cst_162 = arith.constant 1.000000e+00 : f32
    %322 = vector.broadcast %cst_162 : f32 to vector<8x128xf32>
    %323 = arith.addf %322, %321 : vector<8x128xf32>
    %cst_163 = arith.constant 5.000000e-01 : f32
    %324 = vector.broadcast %cst_163 : f32 to vector<8x128xf32>
    %325 = arith.mulf %324, %323 : vector<8x128xf32>
    %326 = vector.extract_strided_slice %317 {offsets = [0, 128], sizes = [8, 128], strides = [1, 1]} : vector<8x512xf32> to vector<8x128xf32>
    %cst_164 = arith.constant 5.000000e-01 : f32
    %327 = vector.broadcast %cst_164 : f32 to vector<8x128xf32>
    %328 = arith.mulf %327, %326 : vector<8x128xf32>
    %329 = math.tanh %328 : vector<8x128xf32>
    %cst_165 = arith.constant 1.000000e+00 : f32
    %330 = vector.broadcast %cst_165 : f32 to vector<8x128xf32>
    %331 = arith.addf %330, %329 : vector<8x128xf32>
    %cst_166 = arith.constant 5.000000e-01 : f32
    %332 = vector.broadcast %cst_166 : f32 to vector<8x128xf32>
    %333 = arith.mulf %332, %331 : vector<8x128xf32>
    %334 = vector.extract_strided_slice %317 {offsets = [0, 256], sizes = [8, 128], strides = [1, 1]} : vector<8x512xf32> to vector<8x128xf32>
    %335 = math.tanh %334 : vector<8x128xf32>
    %336 = vector.extract_strided_slice %317 {offsets = [0, 384], sizes = [8, 128], strides = [1, 1]} : vector<8x512xf32> to vector<8x128xf32>
    %cst_167 = arith.constant 5.000000e-01 : f32
    %337 = vector.broadcast %cst_167 : f32 to vector<8x128xf32>
    %338 = arith.mulf %337, %336 : vector<8x128xf32>
    %339 = math.tanh %338 : vector<8x128xf32>
    %cst_168 = arith.constant 1.000000e+00 : f32
    %340 = vector.broadcast %cst_168 : f32 to vector<8x128xf32>
    %341 = arith.addf %340, %339 : vector<8x128xf32>
    %cst_169 = arith.constant 5.000000e-01 : f32
    %342 = vector.broadcast %cst_169 : f32 to vector<8x128xf32>
    %343 = arith.mulf %342, %341 : vector<8x128xf32>
    %c0_170 = arith.constant 0 : index
    %c0_171 = arith.constant 0 : index
    %344 = vector.load %arg6[%c0_170, %c0_171] : memref<8x128xf32, #tpu.memory_space<vmem>>, vector<8x128xf32>
    %345 = arith.mulf %333, %344 : vector<8x128xf32>
    %346 = arith.mulf %325, %335 : vector<8x128xf32>
    %347 = arith.addf %345, %346 : vector<8x128xf32>
    %348 = math.tanh %347 : vector<8x128xf32>
    %349 = arith.mulf %343, %348 : vector<8x128xf32>
    %c0_172 = arith.constant 0 : index
    %c0_173 = arith.constant 0 : index
    %350 = vector.load %arg6[%c0_172, %c0_173] : memref<8x128xf32, #tpu.memory_space<vmem>>, vector<8x128xf32>
    tpu.vector_store %arg6[%c0_172, %c0_173], %347 {strides = array<i32>} : memref<8x128xf32, #tpu.memory_space<vmem>>, vector<8x128xf32>,
    %c0_174 = arith.constant 0 : index
    %c0_175 = arith.constant 0 : index
    %351 = vector.load %arg5[%c0_174, %c0_175] : memref<8x128xf32, #tpu.memory_space<vmem>>, vector<8x128xf32>
    tpu.vector_store %arg5[%c0_174, %c0_175], %349 {strides = array<i32>} : memref<8x128xf32, #tpu.memory_space<vmem>>, vector<8x128xf32>,
    %352 = arith.index_cast %c7_i32 : i32 to index
    %c0_176 = arith.constant 0 : index
    %c0_177 = arith.constant 0 : index
    %353 = vector.load %arg4[%352, %c0_176, %c0_177] : memref<8x8x128xf32, #tpu.memory_space<vmem>>, vector<1x8x128xf32>
    %354 = vector.shape_cast %353 : vector<1x8x128xf32> to vector<8x128xf32>
    %355 = vector.shape_cast %349 : vector<8x128xf32> to vector<1x8x128xf32>
    tpu.vector_store %arg4[%352, %c0_176, %c0_177], %355 {strides = array<i32>} : memref<8x8x128xf32, #tpu.memory_space<vmem>>, vector<1x8x128xf32>,
    %c8_i32 = arith.constant 8 : i32
    return
  }
  func.func @transform_0(%arg0: i32, %arg1: i32) -> (i32, i32, i32) {
    %c0_i32 = arith.constant 0 : i32
    %c0_i32_0 = arith.constant 0 : i32
    return %arg1, %arg0, %c0_i32 : i32, i32, i32
  }
  func.func @transform_1(%arg0: i32, %arg1: i32) -> (i32, i32) {
    %c0_i32 = arith.constant 0 : i32
    %c0_i32_0 = arith.constant 0 : i32
    %c0_i32_1 = arith.constant 0 : i32
    return %c0_i32, %c0_i32_0 : i32, i32
  }
  func.func @transform_2(%arg0: i32, %arg1: i32) -> (i32, i32, i32) {
    %c0_i32 = arith.constant 0 : i32
    %c0_i32_0 = arith.constant 0 : i32
    return %arg1, %arg0, %c0_i32 : i32, i32, i32
  }
}

</mosaic_0001>

<llo_original>
// kernel: tpu_custom_call.1
$region0: #{tpu_custom_call.1}
  #allocation0 [shape = 'u32[]', space=smem, size = 0x4, offset = 0x4, fixed_abs, tag = 'smem constant byte address 0x4 - core index']
  #allocation1 [shape = 'u32[144,128]{1,0:T(1,128)}', space=vmem, size = 0x12000, scoped, tag = 'internal scratch']
  #allocation2 [shape = 'f32[8,128]{1,0:T(8,128)}', space=vmem, size = 0x1000, scoped, tag = 'scratch operand']
  #allocation3 [shape = 'f32[8,128]{1,0:T(8,128)}', space=vmem, size = 0x1000, scoped, tag = 'scratch operand']
  %s0 = inlined_call_operand.hbm [shape: f32[8,8,512], index: 0, kind: input, shape index: {}]
  %s1 = inlined_call_operand.hbm [shape: f32[128,512], index: 1, kind: input, shape index: {}]
  %s2 = inlined_call_operand.hbm [shape: f32[8,8,128], index: 2, kind: output, shape index: {}]
  %s3 = sld [smem:[#allocation0]]
  $region30: #{tpu_custom_call.1} parent=0
    _
  %s5 = ssub.s32 1, %s3
  %s6 = scalar_select 0, %s5, %s3
  $region1: #{tpu_custom_call.1} parent=0
    #allocation4 [shape = 'u8[131072]{0}', space=vmem, size = 0x20000, scoped, tag = 'input window, operand 0, single buffered']
    #allocation5 [shape = 's32[1]{0}', space=sflag, size = 0x4, scoped, tag = 'scoped memory for tpu_custom_call.1']
    #allocation6 [shape = 's32[1]{0}', space=sflag, size = 0x4, scoped, tag = 'scoped memory for tpu_custom_call.1']
    #allocation7 [shape = 'u8[262144]{0}', space=vmem, size = 0x40000, scoped, tag = 'input window, operand 1, single buffered']
    #allocation8 [shape = 's32[1]{0}', space=sflag, size = 0x4, scoped, tag = 'scoped memory for tpu_custom_call.1']
    #allocation9 [shape = 'u8[32768]{0}', space=vmem, size = 0x8000, scoped, tag = 'output window, operand 0, single buffered']
    %7 = vsyncpa [#allocation5], 0
    %8 = vsyncpa [#allocation8], 0
    %9 = vsyncpa [#allocation6], 0
    // Predicated region
    $region2: #{tpu_custom_call.1} parent=1 // pred_check
      _
    $region3: #{tpu_custom_call.1} parent=1 // pred_check_branch
      %11 = sbr.rel (0) target = $region5
    $region4: #{tpu_custom_call.1} parent=1 // pred_region
      %s13 = ssub.s32 4096, 4096
      %14 = vsyncadd [#allocation5], %s13
      %s15 = sshll.u32 [#allocation4], 4
      %s16 = int_to_ptr.vmem [resolvable:$true] %s15
      %21 = dma.hbm_to_vmem [thread:$0]  %s0, 4096, %s16, [#allocation5], 512, 512, 32
    $region5: #{tpu_custom_call.1} parent=1 // pred_fallthru
      _
    // Predicated region
    $region6: #{tpu_custom_call.1} parent=1 // pred_check
      _
    $region7: #{tpu_custom_call.1} parent=1 // pred_check_branch
      %23 = sbr.rel (0) target = $region9
    $region8: #{tpu_custom_call.1} parent=1 // pred_region
      %s25 = ssub.s32 8192, 8192
      %26 = vsyncadd [#allocation8], %s25
      %s27 = sshll.u32 [#allocation7], 4
      %s28 = int_to_ptr.vmem [resolvable:$true] %s27
      %33 = dma.hbm_to_vmem [thread:$0]  %s1, 8192, %s28, [#allocation8], 512, 512, 32
    $region9: #{tpu_custom_call.1} parent=1 // pred_fallthru
      _
    // Predicated region
    $region10: #{tpu_custom_call.1} parent=1 // pred_check
      _
    $region11: #{tpu_custom_call.1} parent=1 // pred_check_branch
      %35 = sbr.rel (0) target = $region13
    $region12: #{tpu_custom_call.1} parent=1 // pred_region
      %36 = dma.done [#allocation5], 4096
    $region13: #{tpu_custom_call.1} parent=1 // pred_fallthru
      _
    // Predicated region
    $region14: #{tpu_custom_call.1} parent=1 // pred_check
      _
    $region15: #{tpu_custom_call.1} parent=1 // pred_check_branch
      %38 = sbr.rel (0) target = $region17
    $region16: #{tpu_custom_call.1} parent=1 // pred_region
      %39 = dma.done [#allocation8], 8192
    $region17: #{tpu_custom_call.1} parent=1 // pred_fallthru
      _
    %p40 = scmp.eq.s32.totalorder 0, 0
    // Predicated region
    $region18: #{tpu_custom_call.1} parent=1 // pred_check
      %p41 = pneg %p40
    $region19: #{tpu_custom_call.1} parent=1 // pred_check_branch
      %43 = sbr.rel (%p41) target = $region21
    $region20: #{tpu_custom_call.1} parent=1 // pred_region
      %44 = vst [vmem:[#allocation2] sm:$0xff] 0.0
      %45 = vst [vmem:[#allocation3] sm:$0xff] 0.0
    $region21: #{tpu_custom_call.1} parent=1 // pred_fallthru
      _
    %v46 = vld [vmem:[#allocation7] sm:$0xff]
    %v47 = vld [vmem:[#allocation7 + $0x8] sm:$0xff]
    %v48 = vld [vmem:[#allocation7 + $0x10] sm:$0xff]
    %v49 = vld [vmem:[#allocation7 + $0x18] sm:$0xff]
    %v50 = vld [vmem:[#allocation7 + $0x20] sm:$0xff]
    %v51 = vld [vmem:[#allocation7 + $0x28] sm:$0xff]
    %v52 = vld [vmem:[#allocation7 + $0x30] sm:$0xff]
    %v53 = vld [vmem:[#allocation7 + $0x38] sm:$0xff]
    %v54 = vld [vmem:[#allocation7 + $0x40] sm:$0xff]
    %v55 = vld [vmem:[#allocation7 + $0x48] sm:$0xff]
    %v56 = vld [vmem:[#allocation7 + $0x50] sm:$0xff]
    %v57 = vld [vmem:[#allocation7 + $0x58] sm:$0xff]
    %v58 = vld [vmem:[#allocation7 + $0x60] sm:$0xff]
    %v59 = vld [vmem:[#allocation7 + $0x68] sm:$0xff]
    %v60 = vld [vmem:[#allocation7 + $0x70] sm:$0xff]
    %v61 = vld [vmem:[#allocation7 + $0x78] sm:$0xff]
    %v62 = vld [vmem:[#allocation7 + $0x80] sm:$0xff]
    %v63 = vld [vmem:[#allocation7 + $0x88] sm:$0xff]
    %v64 = vld [vmem:[#allocation7 + $0x90] sm:$0xff]
    %v65 = vld [vmem:[#allocation7 + $0x98] sm:$0xff]
    %v66 = vld [vmem:[#allocation7 + $0xa0] sm:$0xff]
    %v67 = vld [vmem:[#allocation7 + $0xa8] sm:$0xff]
    %v68 = vld [vmem:[#allocation7 + $0xb0] sm:$0xff]
    %v69 = vld [vmem:[#allocation7 + $0xb8] sm:$0xff]
    %v70 = vld [vmem:[#allocation7 + $0xc0] sm:$0xff]
    %v71 = vld [vmem:[#allocation7 + $0xc8] sm:$0xff]
    %v72 = vld [vmem:[#allocation7 + $0xd0] sm:$0xff]
    %v73 = vld [vmem:[#allocation7 + $0xd8] sm:$0xff]
    %v74 = vld [vmem:[#allocation7 + $0xe0] sm:$0xff]
    %v75 = vld [vmem:[#allocation7 + $0xe8] sm:$0xff]
    %v76 = vld [vmem:[#allocation7 + $0xf0] sm:$0xff]
    %v77 = vld [vmem:[#allocation7 + $0xf8] sm:$0xff]
    %v78 = vld [vmem:[#allocation7 + $0x100] sm:$0xff]
    %v79 = vld [vmem:[#allocation7 + $0x108] sm:$0xff]
    %v80 = vld [vmem:[#allocation7 + $0x110] sm:$0xff]
    %v81 = vld [vmem:[#allocation7 + $0x118] sm:$0xff]
    %v82 = vld [vmem:[#allocation7 + $0x120] sm:$0xff]
    %v83 = vld [vmem:[#allocation7 + $0x128] sm:$0xff]
    %v84 = vld [vmem:[#allocation7 + $0x130] sm:$0xff]
    %v85 = vld [vmem:[#allocation7 + $0x138] sm:$0xff]
    %v86 = vld [vmem:[#allocation7 + $0x140] sm:$0xff]
    %v87 = vld [vmem:[#allocation7 + $0x148] sm:$0xff]
    %v88 = vld [vmem:[#allocation7 + $0x150] sm:$0xff]
    %v89 = vld [vmem:[#allocation7 + $0x158] sm:$0xff]
    %v90 = vld [vmem:[#allocation7 + $0x160] sm:$0xff]
    %v91 = vld [vmem:[#allocation7 + $0x168] sm:$0xff]
    %v92 = vld [vmem:[#allocation7 + $0x170] sm:$0xff]
    %v93 = vld [vmem:[#allocation7 + $0x178] sm:$0xff]
    %v94 = vld [vmem:[#allocation7 + $0x180] sm:$0xff]
    %v95 = vld [vmem:[#allocation7 + $0x188] sm:$0xff]
    %v96 = vld [vmem:[#allocation7 + $0x190] sm:$0xff]
    %v97 = vld [vmem:[#allocation7 + $0x198] sm:$0xff]
    %v98 = vld [vmem:[#allocation7 + $0x1a0] sm:$0xff]
    %v99 = vld [vmem:[#allocation7 + $0x1a8] sm:$0xff]
    %v100 = vld [vmem:[#allocation7 + $0x1b0] sm:$0xff]
    %v101 = vld [vmem:[#allocation7 + $0x1b8] sm:$0xff]
    %v102 = vld [vmem:[#allocation7 + $0x1c0] sm:$0xff]
    %v103 = vld [vmem:[#allocation7 + $0x1c8] sm:$0xff]
    %v104 = vld [vmem:[#allocation7 + $0x1d0] sm:$0xff]
    %v105 = vld [vmem:[#allocation7 + $0x1d8] sm:$0xff]
    %v106 = vld [vmem:[#allocation7 + $0x1e0] sm:$0xff]
    %v107 = vld [vmem:[#allocation7 + $0x1e8] sm:$0xff]
    %v108 = vld [vmem:[#allocation7 + $0x1f0] sm:$0xff]
    %v109 = vld [vmem:[#allocation7 + $0x1f8] sm:$0xff]
    %v110 = vld [vmem:[#allocation2] sm:$0xff]
    %v111 = vld [vmem:[#allocation4] sm:$0xff]
    %v112 = vld [vmem:[#allocation4 + $0x8] sm:$0xff]
    %v113 = vld [vmem:[#allocation4 + $0x10] sm:$0xff]
    %v114 = vld [vmem:[#allocation4 + $0x18] sm:$0xff]
    %115 = vmatprep.subr.mxu0 %v47
    %116 = vmatpush1.msra.mxu0 %v46
    %117 = vmatprep.subr.mxu0 %v51
    %118 = vmatpush1.msra.mxu0 %v50
    %119 = vmatprep.subr.mxu0 %v55
    %120 = vmatpush1.msra.mxu0 %v54
    %121 = vmatprep.subr.mxu0 %v59
    %122 = vmatpush1.msra.mxu0 %v58
    %123 = vmatprep.subr.mxu0 %v63
    %124 = vmatpush1.msra.mxu0 %v62
    %125 = vmatprep.subr.mxu0 %v67
    %126 = vmatpush1.msra.mxu0 %v66
    %127 = vmatprep.subr.mxu0 %v71
    %128 = vmatpush1.msra.mxu0 %v70
    %129 = vmatprep.subr.mxu0 %v75
    %130 = vmatpush1.msra.mxu0 %v74
    %131 = vmatprep.subr.mxu0 %v79
    %132 = vmatpush1.msra.mxu0 %v78
    %133 = vmatprep.subr.mxu0 %v83
    %134 = vmatpush1.msra.mxu0 %v82
    %135 = vmatprep.subr.mxu0 %v87
    %136 = vmatpush1.msra.mxu0 %v86
    %137 = vmatprep.subr.mxu0 %v91
    %138 = vmatpush1.msra.mxu0 %v90
    %139 = vmatprep.subr.mxu0 %v95
    %140 = vmatpush1.msra.mxu0 %v94
    %141 = vmatprep.subr.mxu0 %v99
    %142 = vmatpush1.msra.mxu0 %v98
    %143 = vmatprep.subr.mxu0 %v103
    %144 = vmatpush1.msra.mxu0 %v102
    %145 = vmatprep.subr.mxu0 %v107
    %146 = vmatpush1.msra.mxu0 %v106
    %147 = vmatprep.subr.mxu0 0.0
    %148 = vmatpush1.msra.mxu0 0.0
    %149 = vmatprep.subr.mxu0 0.0
    %150 = vmatpush1.msra.mxu0 0.0
    %151 = vmatprep.subr.mxu0 0.0
    %152 = vmatpush1.msra.mxu0 0.0
    %153 = vmatprep.subr.mxu0 0.0
    %154 = vmatpush1.msra.mxu0 0.0
    %155 = vmatprep.subr.mxu0 0.0
    %156 = vmatpush1.msra.mxu0 0.0
    %157 = vmatprep.subr.mxu0 0.0
    %158 = vmatpush1.msra.mxu0 0.0
    %159 = vmatprep.subr.mxu0 0.0
    %160 = vmatpush1.msra.mxu0 0.0
    %161 = vmatprep.subr.mxu0 0.0
    %162 = vmatpush1.msra.mxu0 0.0
    %163 = vmatprep.subr.mxu0 0.0
    %164 = vmatpush1.msra.mxu0 0.0
    %165 = vmatprep.subr.mxu0 0.0
    %166 = vmatpush1.msra.mxu0 0.0
    %167 = vmatprep.subr.mxu0 0.0
    %168 = vmatpush1.msra.mxu0 0.0
    %169 = vmatprep.subr.mxu0 0.0
    %170 = vmatpush1.msra.mxu0 0.0
    %171 = vmatprep.subr.mxu0 0.0
    %172 = vmatpush1.msra.mxu0 0.0
    %173 = vmatprep.subr.mxu0 0.0
    %174 = vmatpush1.msra.mxu0 0.0
    %175 = vmatprep.subr.mxu0 0.0
    %176 = vmatpush1.msra.mxu0 0.0
    %177 = vmatprep.subr.mxu0 0.0
    %178 = vmatpush1.msra.mxu0 0.0
    %179 = vmatprep.mubr.f32.mxu0 0.0
    %180 = vmatmul.mubr.f32.gmra.mrb[0].mxu0 %v110
    %v181 = vpop.f32.mrb[0].mxu0
    %v182 = vadd.f32 %v111, %v181
    %v183 = vpop.f32.mrb[0].mxu0
    %v184 = vadd.f32 %v112, %v183
    %185 = vdwg.mxu0
    %186 = vmatprep.subr.mxu0 %v49
    %187 = vmatpush1.msra.mxu0 %v48
    %188 = vmatprep.subr.mxu0 %v53
    %189 = vmatpush1.msra.mxu0 %v52
    %190 = vmatprep.subr.mxu0 %v57
    %191 = vmatpush1.msra.mxu0 %v56
    %192 = vmatprep.subr.mxu0 %v61
    %193 = vmatpush1.msra.mxu0 %v60
    %194 = vmatprep.subr.mxu0 %v65
    %195 = vmatpush1.msra.mxu0 %v64
    %196 = vmatprep.subr.mxu0 %v69
    %197 = vmatpush1.msra.mxu0 %v68
    %198 = vmatprep.subr.mxu0 %v73
    %199 = vmatpush1.msra.mxu0 %v72
    %200 = vmatprep.subr.mxu0 %v77
    %201 = vmatpush1.msra.mxu0 %v76
    %202 = vmatprep.subr.mxu0 %v81
    %203 = vmatpush1.msra.mxu0 %v80
    %204 = vmatprep.subr.mxu0 %v85
    %205 = vmatpush1.msra.mxu0 %v84
    %206 = vmatprep.subr.mxu0 %v89
    %207 = vmatpush1.msra.mxu0 %v88
    %208 = vmatprep.subr.mxu0 %v93
    %209 = vmatpush1.msra.mxu0 %v92
    %210 = vmatprep.subr.mxu0 %v97
    %211 = vmatpush1.msra.mxu0 %v96
    %212 = vmatprep.subr.mxu0 %v101
    %213 = vmatpush1.msra.mxu0 %v100
    %214 = vmatprep.subr.mxu0 %v105
    %215 = vmatpush1.msra.mxu0 %v104
    %216 = vmatprep.subr.mxu0 %v109
    %217 = vmatpush1.msra.mxu0 %v108
    %218 = vmatprep.subr.mxu0 0.0
    %219 = vmatpush1.msra.mxu0 0.0
    %220 = vmatprep.subr.mxu0 0.0
    %221 = vmatpush1.msra.mxu0 0.0
    %222 = vmatprep.subr.mxu0 0.0
    %223 = vmatpush1.msra.mxu0 0.0
    %224 = vmatprep.subr.mxu0 0.0
    %225 = vmatpush1.msra.mxu0 0.0
    %226 = vmatprep.subr.mxu0 0.0
    %227 = vmatpush1.msra.mxu0 0.0
    %228 = vmatprep.subr.mxu0 0.0
    %229 = vmatpush1.msra.mxu0 0.0
    %230 = vmatprep.subr.mxu0 0.0
    %231 = vmatpush1.msra.mxu0 0.0
    %232 = vmatprep.subr.mxu0 0.0
    %233 = vmatpush1.msra.mxu0 0.0
    %234 = vmatprep.subr.mxu0 0.0
    %235 = vmatpush1.msra.mxu0 0.0
    %236 = vmatprep.subr.mxu0 0.0
    %237 = vmatpush1.msra.mxu0 0.0
    %238 = vmatprep.subr.mxu0 0.0
    %239 = vmatpush1.msra.mxu0 0.0
    %240 = vmatprep.subr.mxu0 0.0
    %241 = vmatpush1.msra.mxu0 0.0
    %242 = vmatprep.subr.mxu0 0.0
    %243 = vmatpush1.msra.mxu0 0.0
    %244 = vmatprep.subr.mxu0 0.0
    %245 = vmatpush1.msra.mxu0 0.0
    %246 = vmatprep.subr.mxu0 0.0
    %247 = vmatpush1.msra.mxu0 0.0
    %248 = vmatprep.subr.mxu0 0.0
    %249 = vmatpush1.msra.mxu0 0.0
    %250 = vmatprep.mubr.f32.mxu0 0.0
    %251 = vmatmul.mubr.f32.gmra.mrb[0].mxu0 %v110
    %v252 = vpop.f32.mrb[0].mxu0
    %v253 = vadd.f32 %v113, %v252
    %v254 = vpop.f32.mrb[0].mxu0
    %v255 = vadd.f32 %v114, %v254
    %256 = vdwg.mxu0
    %v257 = vmul.f32 %v182, 0.5
    %v258 = vtanh.pop %v257
    %v259 = vadd.f32 %v258, 1.0
    %v260 = vmul.f32 %v259, 0.5
    %v261 = vmul.f32 %v184, 0.5
    %v262 = vtanh.pop %v261
    %v263 = vadd.f32 %v262, 1.0
    %v264 = vmul.f32 %v263, 0.5
    %v265 = vtanh.pop %v253
    %v266 = vmul.f32 %v255, 0.5
    %v267 = vtanh.pop %v266
    %v268 = vadd.f32 %v267, 1.0
    %v269 = vmul.f32 %v268, 0.5
    %v270 = vld [vmem:[#allocation3] sm:$0xff]
    %v271 = vmul.f32 %v264, %v270
    %v272 = vmul.f32 %v260, %v265
    %v273 = vadd.f32 %v271, %v272
    %v274 = vtanh.pop %v273
    %v275 = vmul.f32 %v269, %v274
    %276 = vst [vmem:[#allocation3] sm:$0xff] %v273
    %277 = vst [vmem:[#allocation2] sm:$0xff] %v275
    %278 = vst [vmem:[#allocation9] sm:$0xff] %v275
    %v279 = vld [vmem:[#allocation2] sm:$0xff]
    %s280 = scalar_lea.vmem [#allocation4], 32
    %v281 = vld [vmem:[%s280] sm:$0xff]
    %v282 = vld [vmem:[%s280 + $0x8] sm:$0xff]
    %v283 = vld [vmem:[%s280 + $0x10] sm:$0xff]
    %v284 = vld [vmem:[%s280 + $0x18] sm:$0xff]
    %285 = vmatprep.subr.mxu0 %v47
    %286 = vmatpush1.msra.mxu0 %v46
    %287 = vmatprep.subr.mxu0 %v51
    %288 = vmatpush1.msra.mxu0 %v50
    %289 = vmatprep.subr.mxu0 %v55
    %290 = vmatpush1.msra.mxu0 %v54
    %291 = vmatprep.subr.mxu0 %v59
    %292 = vmatpush1.msra.mxu0 %v58
    %293 = vmatprep.subr.mxu0 %v63
    %294 = vmatpush1.msra.mxu0 %v62
    %295 = vmatprep.subr.mxu0 %v67
    %296 = vmatpush1.msra.mxu0 %v66
    %297 = vmatprep.subr.mxu0 %v71
    %298 = vmatpush1.msra.mxu0 %v70
    %299 = vmatprep.subr.mxu0 %v75
    %300 = vmatpush1.msra.mxu0 %v74
    %301 = vmatprep.subr.mxu0 %v79
    %302 = vmatpush1.msra.mxu0 %v78
    %303 = vmatprep.subr.mxu0 %v83
    %304 = vmatpush1.msra.mxu0 %v82
    %305 = vmatprep.subr.mxu0 %v87
    %306 = vmatpush1.msra.mxu0 %v86
    %307 = vmatprep.subr.mxu0 %v91
    %308 = vmatpush1.msra.mxu0 %v90
    %309 = vmatprep.subr.mxu0 %v95
    %310 = vmatpush1.msra.mxu0 %v94
    %311 = vmatprep.subr.mxu0 %v99
    %312 = vmatpush1.msra.mxu0 %v98
    %313 = vmatprep.subr.mxu0 %v103
    %314 = vmatpush1.msra.mxu0 %v102
    %315 = vmatprep.subr.mxu0 %v107
    %316 = vmatpush1.msra.mxu0 %v106
    %317 = vmatprep.subr.mxu0 0.0
    %318 = vmatpush1.msra.mxu0 0.0
    %319 = vmatprep.subr.mxu0 0.0
    %320 = vmatpush1.msra.mxu0 0.0
    %321 = vmatprep.subr.mxu0 0.0
    %322 = vmatpush1.msra.mxu0 0.0
    %323 = vmatprep.subr.mxu0 0.0
    %324 = vmatpush1.msra.mxu0 0.0
    %325 = vmatprep.subr.mxu0 0.0
    %326 = vmatpush1.msra.mxu0 0.0
    %327 = vmatprep.subr.mxu0 0.0
    %328 = vmatpush1.msra.mxu0 0.0
    %329 = vmatprep.subr.mxu0 0.0
    %330 = vmatpush1.msra.mxu0 0.0
    %331 = vmatprep.subr.mxu0 0.0
    %332 = vmatpush1.msra.mxu0 0.0
    %333 = vmatprep.subr.mxu0 0.0
    %334 = vmatpush1.msra.mxu0 0.0
    %335 = vmatprep.subr.mxu0 0.0
    %336 = vmatpush1.msra.mxu0 0.0
    %337 = vmatprep.subr.mxu0 0.0
    %338 = vmatpush1.msra.mxu0 0.0
    %339 = vmatprep.subr.mxu0 0.0
    %340 = vmatpush1.msra.mxu0 0.0
    %341 = vmatprep.subr.mxu0 0.0
    %342 = vmatpush1.msra.mxu0 0.0
    %343 = vmatprep.subr.mxu0 0.0
    %344 = vmatpush1.msra.mxu0 0.0
    %345 = vmatprep.subr.mxu0 0.0
    %346 = vmatpush1.msra.mxu0 0.0
    %347 = vmatprep.subr.mxu0 0.0
    %348 = vmatpush1.msra.mxu0 0.0
    %349 = vmatprep.mubr.f32.mxu0 0.0
    %350 = vmatmul.mubr.f32.gmra.mrb[0].mxu0 %v279
    %v351 = vpop.f32.mrb[0].mxu0
    %v352 = vadd.f32 %v281, %v351
    %v353 = vpop.f32.mrb[0].mxu0
    %v354 = vadd.f32 %v282, %v353
    %355 = vdwg.mxu0
    %356 = vmatprep.subr.mxu0 %v49
    %357 = vmatpush1.msra.mxu0 %v48
    %358 = vmatprep.subr.mxu0 %v53
    %359 = vmatpush1.msra.mxu0 %v52
    %360 = vmatprep.subr.mxu0 %v57
    %361 = vmatpush1.msra.mxu0 %v56
    %362 = vmatprep.subr.mxu0 %v61
    %363 = vmatpush1.msra.mxu0 %v60
    %364 = vmatprep.subr.mxu0 %v65
    %365 = vmatpush1.msra.mxu0 %v64
    %366 = vmatprep.subr.mxu0 %v69
    %367 = vmatpush1.msra.mxu0 %v68
    %368 = vmatprep.subr.mxu0 %v73
    %369 = vmatpush1.msra.mxu0 %v72
    %370 = vmatprep.subr.mxu0 %v77
    %371 = vmatpush1.msra.mxu0 %v76
    %372 = vmatprep.subr.mxu0 %v81
    %373 = vmatpush1.msra.mxu0 %v80
    %374 = vmatprep.subr.mxu0 %v85
    %375 = vmatpush1.msra.mxu0 %v84
    %376 = vmatprep.subr.mxu0 %v89
    %377 = vmatpush1.msra.mxu0 %v88
    %378 = vmatprep.subr.mxu0 %v93
    %379 = vmatpush1.msra.mxu0 %v92
    %380 = vmatprep.subr.mxu0 %v97
    %381 = vmatpush1.msra.mxu0 %v96
    %382 = vmatprep.subr.mxu0 %v101
    %383 = vmatpush1.msra.mxu0 %v100
    %384 = vmatprep.subr.mxu0 %v105
    %385 = vmatpush1.msra.mxu0 %v104
    %386 = vmatprep.subr.mxu0 %v109
    %387 = vmatpush1.msra.mxu0 %v108
    %388 = vmatprep.subr.mxu0 0.0
    %389 = vmatpush1.msra.mxu0 0.0
    %390 = vmatprep.subr.mxu0 0.0
    %391 = vmatpush1.msra.mxu0 0.0
    %392 = vmatprep.subr.mxu0 0.0
    %393 = vmatpush1.msra.mxu0 0.0
    %394 = vmatprep.subr.mxu0 0.0
    %395 = vmatpush1.msra.mxu0 0.0
    %396 = vmatprep.subr.mxu0 0.0
    %397 = vmatpush1.msra.mxu0 0.0
    %398 = vmatprep.subr.mxu0 0.0
    %399 = vmatpush1.msra.mxu0 0.0
    %400 = vmatprep.subr.mxu0 0.0
    %401 = vmatpush1.msra.mxu0 0.0
    %402 = vmatprep.subr.mxu0 0.0
    %403 = vmatpush1.msra.mxu0 0.0
    %404 = vmatprep.subr.mxu0 0.0
    %405 = vmatpush1.msra.mxu0 0.0
    %406 = vmatprep.subr.mxu0 0.0
    %407 = vmatpush1.msra.mxu0 0.0
    %408 = vmatprep.subr.mxu0 0.0
    %409 = vmatpush1.msra.mxu0 0.0
    %410 = vmatprep.subr.mxu0 0.0
    %411 = vmatpush1.msra.mxu0 0.0
    %412 = vmatprep.subr.mxu0 0.0
    %413 = vmatpush1.msra.mxu0 0.0
    %414 = vmatprep.subr.mxu0 0.0
    %415 = vmatpush1.msra.mxu0 0.0
    %416 = vmatprep.subr.mxu0 0.0
    %417 = vmatpush1.msra.mxu0 0.0
    %418 = vmatprep.subr.mxu0 0.0
    %419 = vmatpush1.msra.mxu0 0.0
    %420 = vmatprep.mubr.f32.mxu0 0.0
    %421 = vmatmul.mubr.f32.gmra.mrb[0].mxu0 %v279
    %v422 = vpop.f32.mrb[0].mxu0
    %v423 = vadd.f32 %v283, %v422
    %v424 = vpop.f32.mrb[0].mxu0
    %v425 = vadd.f32 %v284, %v424
    %426 = vdwg.mxu0
    %v427 = vmul.f32 %v352, 0.5
    %v428 = vtanh.pop %v427
    %v429 = vadd.f32 %v428, 1.0
    %v430 = vmul.f32 %v429, 0.5
    %v431 = vmul.f32 %v354, 0.5
    %v432 = vtanh.pop %v431
    %v433 = vadd.f32 %v432, 1.0
    %v434 = vmul.f32 %v433, 0.5
    %v435 = vtanh.pop %v423
    %v436 = vmul.f32 %v425, 0.5
    %v437 = vtanh.pop %v436
    %v438 = vadd.f32 %v437, 1.0
    %v439 = vmul.f32 %v438, 0.5
    %v440 = vld [vmem:[#allocation3] sm:$0xff]
    %v441 = vmul.f32 %v434, %v440
    %v442 = vmul.f32 %v430, %v435
    %v443 = vadd.f32 %v441, %v442
    %v444 = vtanh.pop %v443
    %v445 = vmul.f32 %v439, %v444
    %446 = vst [vmem:[#allocation3] sm:$0xff] %v443
    %447 = vst [vmem:[#allocation2] sm:$0xff] %v445
    %s448 = scalar_lea.vmem [#allocation9], 8
    %449 = vst [vmem:[%s448] sm:$0xff] %v445
    %v450 = vld [vmem:[#allocation2] sm:$0xff]
    %s451 = scalar_lea.vmem [#allocation4], 64
    %v452 = vld [vmem:[%s451] sm:$0xff]
    %v453 = vld [vmem:[%s451 + $0x8] sm:$0xff]
    %v454 = vld [vmem:[%s451 + $0x10] sm:$0xff]
    %v455 = vld [vmem:[%s451 + $0x18] sm:$0xff]
    %456 = vmatprep.subr.mxu0 %v47
    %457 = vmatpush1.msra.mxu0 %v46
    %458 = vmatprep.subr.mxu0 %v51
    %459 = vmatpush1.msra.mxu0 %v50
    %460 = vmatprep.subr.mxu0 %v55
    %461 = vmatpush1.msra.mxu0 %v54
    %462 = vmatprep.subr.mxu0 %v59
    %463 = vmatpush1.msra.mxu0 %v58
    %464 = vmatprep.subr.mxu0 %v63
    %465 = vmatpush1.msra.mxu0 %v62
    %466 = vmatprep.subr.mxu0 %v67
    %467 = vmatpush1.msra.mxu0 %v66
    %468 = vmatprep.subr.mxu0 %v71
    %469 = vmatpush1.msra.mxu0 %v70
    %470 = vmatprep.subr.mxu0 %v75
    %471 = vmatpush1.msra.mxu0 %v74
    %472 = vmatprep.subr.mxu0 %v79
    %473 = vmatpush1.msra.mxu0 %v78
    %474 = vmatprep.subr.mxu0 %v83
    %475 = vmatpush1.msra.mxu0 %v82
    %476 = vmatprep.subr.mxu0 %v87
    %477 = vmatpush1.msra.mxu0 %v86
    %478 = vmatprep.subr.mxu0 %v91
    %479 = vmatpush1.msra.mxu0 %v90
    %480 = vmatprep.subr.mxu0 %v95
    %481 = vmatpush1.msra.mxu0 %v94
    %482 = vmatprep.subr.mxu0 %v99
    %483 = vmatpush1.msra.mxu0 %v98
    %484 = vmatprep.subr.mxu0 %v103
    %485 = vmatpush1.msra.mxu0 %v102
    %486 = vmatprep.subr.mxu0 %v107
    %487 = vmatpush1.msra.mxu0 %v106
    %488 = vmatprep.subr.mxu0 0.0
    %489 = vmatpush1.msra.mxu0 0.0
    %490 = vmatprep.subr.mxu0 0.0
    %491 = vmatpush1.msra.mxu0 0.0
    %492 = vmatprep.subr.mxu0 0.0
    %493 = vmatpush1.msra.mxu0 0.0
    %494 = vmatprep.subr.mxu0 0.0
    %495 = vmatpush1.msra.mxu0 0.0
    %496 = vmatprep.subr.mxu0 0.0
    %497 = vmatpush1.msra.mxu0 0.0
    %498 = vmatprep.subr.mxu0 0.0
    %499 = vmatpush1.msra.mxu0 0.0
    %500 = vmatprep.subr.mxu0 0.0
    %501 = vmatpush1.msra.mxu0 0.0
    %502 = vmatprep.subr.mxu0 0.0
    %503 = vmatpush1.msra.mxu0 0.0
    %504 = vmatprep.subr.mxu0 0.0
    %505 = vmatpush1.msra.mxu0 0.0
    %506 = vmatprep.subr.mxu0 0.0
    %507 = vmatpush1.msra.mxu0 0.0
    %508 = vmatprep.subr.mxu0 0.0
    %509 = vmatpush1.msra.mxu0 0.0
    %510 = vmatprep.subr.mxu0 0.0
    %511 = vmatpush1.msra.mxu0 0.0
    %512 = vmatprep.subr.mxu0 0.0
    %513 = vmatpush1.msra.mxu0 0.0
    %514 = vmatprep.subr.mxu0 0.0
    %515 = vmatpush1.msra.mxu0 0.0
    %516 = vmatprep.subr.mxu0 0.0
    %517 = vmatpush1.msra.mxu0 0.0
    %518 = vmatprep.subr.mxu0 0.0
    %519 = vmatpush1.msra.mxu0 0.0
    %520 = vmatprep.mubr.f32.mxu0 0.0
    %521 = vmatmul.mubr.f32.gmra.mrb[0].mxu0 %v450
    %v522 = vpop.f32.mrb[0].mxu0
    %v523 = vadd.f32 %v452, %v522
    %v524 = vpop.f32.mrb[0].mxu0
    %v525 = vadd.f32 %v453, %v524
    %526 = vdwg.mxu0
    %527 = vmatprep.subr.mxu0 %v49
    %528 = vmatpush1.msra.mxu0 %v48
    %529 = vmatprep.subr.mxu0 %v53
    %530 = vmatpush1.msra.mxu0 %v52
    %531 = vmatprep.subr.mxu0 %v57
    %532 = vmatpush1.msra.mxu0 %v56
    %533 = vmatprep.subr.mxu0 %v61
    %534 = vmatpush1.msra.mxu0 %v60
    %535 = vmatprep.subr.mxu0 %v65
    %536 = vmatpush1.msra.mxu0 %v64
    %537 = vmatprep.subr.mxu0 %v69
    %538 = vmatpush1.msra.mxu0 %v68
    %539 = vmatprep.subr.mxu0 %v73
    %540 = vmatpush1.msra.mxu0 %v72
    %541 = vmatprep.subr.mxu0 %v77
    %542 = vmatpush1.msra.mxu0 %v76
    %543 = vmatprep.subr.mxu0 %v81
    %544 = vmatpush1.msra.mxu0 %v80
    %545 = vmatprep.subr.mxu0 %v85
    %546 = vmatpush1.msra.mxu0 %v84
    %547 = vmatprep.subr.mxu0 %v89
    %548 = vmatpush1.msra.mxu0 %v88
    %549 = vmatprep.subr.mxu0 %v93
    %550 = vmatpush1.msra.mxu0 %v92
    %551 = vmatprep.subr.mxu0 %v97
    %552 = vmatpush1.msra.mxu0 %v96
    %553 = vmatprep.subr.mxu0 %v101
    %554 = vmatpush1.msra.mxu0 %v100
    %555 = vmatprep.subr.mxu0 %v105
    %556 = vmatpush1.msra.mxu0 %v104
    %557 = vmatprep.subr.mxu0 %v109
    %558 = vmatpush1.msra.mxu0 %v108
    %559 = vmatprep.subr.mxu0 0.0
    %560 = vmatpush1.msra.mxu0 0.0
    %561 = vmatprep.subr.mxu0 0.0
    %562 = vmatpush1.msra.mxu0 0.0
    %563 = vmatprep.subr.mxu0 0.0
    %564 = vmatpush1.msra.mxu0 0.0
    %565 = vmatprep.subr.mxu0 0.0
    %566 = vmatpush1.msra.mxu0 0.0
    %567 = vmatprep.subr.mxu0 0.0
    %568 = vmatpush1.msra.mxu0 0.0
    %569 = vmatprep.subr.mxu0 0.0
    %570 = vmatpush1.msra.mxu0 0.0
    %571 = vmatprep.subr.mxu0 0.0
    %572 = vmatpush1.msra.mxu0 0.0
    %573 = vmatprep.subr.mxu0 0.0
    %574 = vmatpush1.msra.mxu0 0.0
    %575 = vmatprep.subr.mxu0 0.0
    %576 = vmatpush1.msra.mxu0 0.0
    %577 = vmatprep.subr.mxu0 0.0
    %578 = vmatpush1.msra.mxu0 0.0
    %579 = vmatprep.subr.mxu0 0.0
    %580 = vmatpush1.msra.mxu0 0.0
    %581 = vmatprep.subr.mxu0 0.0
    %582 = vmatpush1.msra.mxu0 0.0
    %583 = vmatprep.subr.mxu0 0.0
    %584 = vmatpush1.msra.mxu0 0.0
    %585 = vmatprep.subr.mxu0 0.0
    %586 = vmatpush1.msra.mxu0 0.0
    %587 = vmatprep.subr.mxu0 0.0
    %588 = vmatpush1.msra.mxu0 0.0
    %589 = vmatprep.subr.mxu0 0.0
    %590 = vmatpush1.msra.mxu0 0.0
    %591 = vmatprep.mubr.f32.mxu0 0.0
    %592 = vmatmul.mubr.f32.gmra.mrb[0].mxu0 %v450
    %v593 = vpop.f32.mrb[0].mxu0
    %v594 = vadd.f32 %v454, %v593
    %v595 = vpop.f32.mrb[0].mxu0
    %v596 = vadd.f32 %v455, %v595
    %597 = vdwg.mxu0
    %v598 = vmul.f32 %v523, 0.5
    %v599 = vtanh.pop %v598
    %v600 = vadd.f32 %v599, 1.0
    %v601 = vmul.f32 %v600, 0.5
    %v602 = vmul.f32 %v525, 0.5
    %v603 = vtanh.pop %v602
    %v604 = vadd.f32 %v603, 1.0
    %v605 = vmul.f32 %v604, 0.5
    %v606 = vtanh.pop %v594
    %v607 = vmul.f32 %v596, 0.5
    %v608 = vtanh.pop %v607
    %v609 = vadd.f32 %v608, 1.0
    %v610 = vmul.f32 %v609, 0.5
    %v611 = vld [vmem:[#allocation3] sm:$0xff]
    %v612 = vmul.f32 %v605, %v611
    %v613 = vmul.f32 %v601, %v606
    %v614 = vadd.f32 %v612, %v613
    %v615 = vtanh.pop %v614
    %v616 = vmul.f32 %v610, %v615
    %617 = vst [vmem:[#allocation3] sm:$0xff] %v614
    %618 = vst [vmem:[#allocation2] sm:$0xff] %v616
    %s619 = scalar_lea.vmem [#allocation9], 16
    %620 = vst [vmem:[%s619] sm:$0xff] %v616
    %v621 = vld [vmem:[#allocation2] sm:$0xff]
    %s622 = scalar_lea.vmem [#allocation4], 96
    %v623 = vld [vmem:[%s622] sm:$0xff]
    %v624 = vld [vmem:[%s622 + $0x8] sm:$0xff]
    %v625 = vld [vmem:[%s622 + $0x10] sm:$0xff]
    %v626 = vld [vmem:[%s622 + $0x18] sm:$0xff]
    %627 = vmatprep.subr.mxu0 %v47
    %628 = vmatpush1.msra.mxu0 %v46
    %629 = vmatprep.subr.mxu0 %v51
    %630 = vmatpush1.msra.mxu0 %v50
    %631 = vmatprep.subr.mxu0 %v55
    %632 = vmatpush1.msra.mxu0 %v54
    %633 = vmatprep.subr.mxu0 %v59
    %634 = vmatpush1.msra.mxu0 %v58
    %635 = vmatprep.subr.mxu0 %v63
    %636 = vmatpush1.msra.mxu0 %v62
    %637 = vmatprep.subr.mxu0 %v67
    %638 = vmatpush1.msra.mxu0 %v66
    %639 = vmatprep.subr.mxu0 %v71
    %640 = vmatpush1.msra.mxu0 %v70
    %641 = vmatprep.subr.mxu0 %v75
    %642 = vmatpush1.msra.mxu0 %v74
    %643 = vmatprep.subr.mxu0 %v79
    %644 = vmatpush1.msra.mxu0 %v78
    %645 = vmatprep.subr.mxu0 %v83
    %646 = vmatpush1.msra.mxu0 %v82
    %647 = vmatprep.subr.mxu0 %v87
    %648 = vmatpush1.msra.mxu0 %v86
    %649 = vmatprep.subr.mxu0 %v91
    %650 = vmatpush1.msra.mxu0 %v90
    %651 = vmatprep.subr.mxu0 %v95
    %652 = vmatpush1.msra.mxu0 %v94
    %653 = vmatprep.subr.mxu0 %v99
    %654 = vmatpush1.msra.mxu0 %v98
    %655 = vmatprep.subr.mxu0 %v103
    %656 = vmatpush1.msra.mxu0 %v102
    %657 = vmatprep.subr.mxu0 %v107
    %658 = vmatpush1.msra.mxu0 %v106
    %659 = vmatprep.subr.mxu0 0.0
    %660 = vmatpush1.msra.mxu0 0.0
    %661 = vmatprep.subr.mxu0 0.0
    %662 = vmatpush1.msra.mxu0 0.0
    %663 = vmatprep.subr.mxu0 0.0
    %664 = vmatpush1.msra.mxu0 0.0
    %665 = vmatprep.subr.mxu0 0.0
    %666 = vmatpush1.msra.mxu0 0.0
    %667 = vmatprep.subr.mxu0 0.0
    %668 = vmatpush1.msra.mxu0 0.0
    %669 = vmatprep.subr.mxu0 0.0
    %670 = vmatpush1.msra.mxu0 0.0
    %671 = vmatprep.subr.mxu0 0.0
    %672 = vmatpush1.msra.mxu0 0.0
    %673 = vmatprep.subr.mxu0 0.0
    %674 = vmatpush1.msra.mxu0 0.0
    %675 = vmatprep.subr.mxu0 0.0
    %676 = vmatpush1.msra.mxu0 0.0
    %677 = vmatprep.subr.mxu0 0.0
    %678 = vmatpush1.msra.mxu0 0.0
    %679 = vmatprep.subr.mxu0 0.0
    %680 = vmatpush1.msra.mxu0 0.0
    %681 = vmatprep.subr.mxu0 0.0
    %682 = vmatpush1.msra.mxu0 0.0
    %683 = vmatprep.subr.mxu0 0.0
    %684 = vmatpush1.msra.mxu0 0.0
    %685 = vmatprep.subr.mxu0 0.0
    %686 = vmatpush1.msra.mxu0 0.0
    %687 = vmatprep.subr.mxu0 0.0
    %688 = vmatpush1.msra.mxu0 0.0
    %689 = vmatprep.subr.mxu0 0.0
    %690 = vmatpush1.msra.mxu0 0.0
    %691 = vmatprep.mubr.f32.mxu0 0.0
    %692 = vmatmul.mubr.f32.gmra.mrb[0].mxu0 %v621
    %v693 = vpop.f32.mrb[0].mxu0
    %v694 = vadd.f32 %v623, %v693
    %v695 = vpop.f32.mrb[0].mxu0
    %v696 = vadd.f32 %v624, %v695
    %697 = vdwg.mxu0
    %698 = vmatprep.subr.mxu0 %v49
    %699 = vmatpush1.msra.mxu0 %v48
    %700 = vmatprep.subr.mxu0 %v53
    %701 = vmatpush1.msra.mxu0 %v52
    %702 = vmatprep.subr.mxu0 %v57
    %703 = vmatpush1.msra.mxu0 %v56
    %704 = vmatprep.subr.mxu0 %v61
    %705 = vmatpush1.msra.mxu0 %v60
    %706 = vmatprep.subr.mxu0 %v65
    %707 = vmatpush1.msra.mxu0 %v64
    %708 = vmatprep.subr.mxu0 %v69
    %709 = vmatpush1.msra.mxu0 %v68
    %710 = vmatprep.subr.mxu0 %v73
    %711 = vmatpush1.msra.mxu0 %v72
    %712 = vmatprep.subr.mxu0 %v77
    %713 = vmatpush1.msra.mxu0 %v76
    %714 = vmatprep.subr.mxu0 %v81
    %715 = vmatpush1.msra.mxu0 %v80
    %716 = vmatprep.subr.mxu0 %v85
    %717 = vmatpush1.msra.mxu0 %v84
    %718 = vmatprep.subr.mxu0 %v89
    %719 = vmatpush1.msra.mxu0 %v88
    %720 = vmatprep.subr.mxu0 %v93
    %721 = vmatpush1.msra.mxu0 %v92
    %722 = vmatprep.subr.mxu0 %v97
    %723 = vmatpush1.msra.mxu0 %v96
    %724 = vmatprep.subr.mxu0 %v101
    %725 = vmatpush1.msra.mxu0 %v100
    %726 = vmatprep.subr.mxu0 %v105
    %727 = vmatpush1.msra.mxu0 %v104
    %728 = vmatprep.subr.mxu0 %v109
    %729 = vmatpush1.msra.mxu0 %v108
    %730 = vmatprep.subr.mxu0 0.0
    %731 = vmatpush1.msra.mxu0 0.0
    %732 = vmatprep.subr.mxu0 0.0
    %733 = vmatpush1.msra.mxu0 0.0
    %734 = vmatprep.subr.mxu0 0.0
    %735 = vmatpush1.msra.mxu0 0.0
    %736 = vmatprep.subr.mxu0 0.0
    %737 = vmatpush1.msra.mxu0 0.0
    %738 = vmatprep.subr.mxu0 0.0
    %739 = vmatpush1.msra.mxu0 0.0
    %740 = vmatprep.subr.mxu0 0.0
    %741 = vmatpush1.msra.mxu0 0.0
    %742 = vmatprep.subr.mxu0 0.0
    %743 = vmatpush1.msra.mxu0 0.0
    %744 = vmatprep.subr.mxu0 0.0
    %745 = vmatpush1.msra.mxu0 0.0
    %746 = vmatprep.subr.mxu0 0.0
    %747 = vmatpush1.msra.mxu0 0.0
    %748 = vmatprep.subr.mxu0 0.0
    %749 = vmatpush1.msra.mxu0 0.0
    %750 = vmatprep.subr.mxu0 0.0
    %751 = vmatpush1.msra.mxu0 0.0
    %752 = vmatprep.subr.mxu0 0.0
    %753 = vmatpush1.msra.mxu0 0.0
    %754 = vmatprep.subr.mxu0 0.0
    %755 = vmatpush1.msra.mxu0 0.0
    %756 = vmatprep.subr.mxu0 0.0
    %757 = vmatpush1.msra.mxu0 0.0
    %758 = vmatprep.subr.mxu0 0.0
    %759 = vmatpush1.msra.mxu0 0.0
    %760 = vmatprep.subr.mxu0 0.0
    %761 = vmatpush1.msra.mxu0 0.0
    %762 = vmatprep.mubr.f32.mxu0 0.0
    %763 = vmatmul.mubr.f32.gmra.mrb[0].mxu0 %v621
    %v764 = vpop.f32.mrb[0].mxu0
    %v765 = vadd.f32 %v625, %v764
    %v766 = vpop.f32.mrb[0].mxu0
    %v767 = vadd.f32 %v626, %v766
    %768 = vdwg.mxu0
    %v769 = vmul.f32 %v694, 0.5
    %v770 = vtanh.pop %v769
    %v771 = vadd.f32 %v770, 1.0
    %v772 = vmul.f32 %v771, 0.5
    %v773 = vmul.f32 %v696, 0.5
    %v774 = vtanh.pop %v773
    %v775 = vadd.f32 %v774, 1.0
    %v776 = vmul.f32 %v775, 0.5
    %v777 = vtanh.pop %v765
    %v778 = vmul.f32 %v767, 0.5
    %v779 = vtanh.pop %v778
    %v780 = vadd.f32 %v779, 1.0
    %v781 = vmul.f32 %v780, 0.5
    %v782 = vld [vmem:[#allocation3] sm:$0xff]
    %v783 = vmul.f32 %v776, %v782
    %v784 = vmul.f32 %v772, %v777
    %v785 = vadd.f32 %v783, %v784
    %v786 = vtanh.pop %v785
    %v787 = vmul.f32 %v781, %v786
    %788 = vst [vmem:[#allocation3] sm:$0xff] %v785
    %789 = vst [vmem:[#allocation2] sm:$0xff] %v787
    %s790 = scalar_lea.vmem [#allocation9], 24
    %791 = vst [vmem:[%s790] sm:$0xff] %v787
    %v792 = vld [vmem:[#allocation2] sm:$0xff]
    %s793 = scalar_lea.vmem [#allocation4], 128
    %v794 = vld [vmem:[%s793] sm:$0xff]
    %v795 = vld [vmem:[%s793 + $0x8] sm:$0xff]
    %v796 = vld [vmem:[%s793 + $0x10] sm:$0xff]
    %v797 = vld [vmem:[%s793 + $0x18] sm:$0xff]
    %798 = vmatprep.subr.mxu0 %v47
    %799 = vmatpush1.msra.mxu0 %v46
    %800 = vmatprep.subr.mxu0 %v51
    %801 = vmatpush1.msra.mxu0 %v50
    %802 = vmatprep.subr.mxu0 %v55
    %803 = vmatpush1.msra.mxu0 %v54
    %804 = vmatprep.subr.mxu0 %v59
    %805 = vmatpush1.msra.mxu0 %v58
    %806 = vmatprep.subr.mxu0 %v63
    %807 = vmatpush1.msra.mxu0 %v62
    %808 = vmatprep.subr.mxu0 %v67
    %809 = vmatpush1.msra.mxu0 %v66
    %810 = vmatprep.subr.mxu0 %v71
    %811 = vmatpush1.msra.mxu0 %v70
    %812 = vmatprep.subr.mxu0 %v75
    %813 = vmatpush1.msra.mxu0 %v74
    %814 = vmatprep.subr.mxu0 %v79
    %815 = vmatpush1.msra.mxu0 %v78
    %816 = vmatprep.subr.mxu0 %v83
    %817 = vmatpush1.msra.mxu0 %v82
    %818 = vmatprep.subr.mxu0 %v87
    %819 = vmatpush1.msra.mxu0 %v86
    %820 = vmatprep.subr.mxu0 %v91
    %821 = vmatpush1.msra.mxu0 %v90
    %822 = vmatprep.subr.mxu0 %v95
    %823 = vmatpush1.msra.mxu0 %v94
    %824 = vmatprep.subr.mxu0 %v99
    %825 = vmatpush1.msra.mxu0 %v98
    %826 = vmatprep.subr.mxu0 %v103
    %827 = vmatpush1.msra.mxu0 %v102
    %828 = vmatprep.subr.mxu0 %v107
    %829 = vmatpush1.msra.mxu0 %v106
    %830 = vmatprep.subr.mxu0 0.0
    %831 = vmatpush1.msra.mxu0 0.0
    %832 = vmatprep.subr.mxu0 0.0
    %833 = vmatpush1.msra.mxu0 0.0
    %834 = vmatprep.subr.mxu0 0.0
    %835 = vmatpush1.msra.mxu0 0.0
    %836 = vmatprep.subr.mxu0 0.0
    %837 = vmatpush1.msra.mxu0 0.0
    %838 = vmatprep.subr.mxu0 0.0
    %839 = vmatpush1.msra.mxu0 0.0
    %840 = vmatprep.subr.mxu0 0.0
    %841 = vmatpush1.msra.mxu0 0.0
    %842 = vmatprep.subr.mxu0 0.0
    %843 = vmatpush1.msra.mxu0 0.0
    %844 = vmatprep.subr.mxu0 0.0
    %845 = vmatpush1.msra.mxu0 0.0
    %846 = vmatprep.subr.mxu0 0.0
    %847 = vmatpush1.msra.mxu0 0.0
    %848 = vmatprep.subr.mxu0 0.0
    %849 = vmatpush1.msra.mxu0 0.0
    %850 = vmatprep.subr.mxu0 0.0
    %851 = vmatpush1.msra.mxu0 0.0
    %852 = vmatprep.subr.mxu0 0.0
    %853 = vmatpush1.msra.mxu0 0.0
    %854 = vmatprep.subr.mxu0 0.0
    %855 = vmatpush1.msra.mxu0 0.0
    %856 = vmatprep.subr.mxu0 0.0
    %857 = vmatpush1.msra.mxu0 0.0
    %858 = vmatprep.subr.mxu0 0.0
    %859 = vmatpush1.msra.mxu0 0.0
    %860 = vmatprep.subr.mxu0 0.0
    %861 = vmatpush1.msra.mxu0 0.0
    %862 = vmatprep.mubr.f32.mxu0 0.0
    %863 = vmatmul.mubr.f32.gmra.mrb[0].mxu0 %v792
    %v864 = vpop.f32.mrb[0].mxu0
    %v865 = vadd.f32 %v794, %v864
    %v866 = vpop.f32.mrb[0].mxu0
    %v867 = vadd.f32 %v795, %v866
    %868 = vdwg.mxu0
    %869 = vmatprep.subr.mxu0 %v49
    %870 = vmatpush1.msra.mxu0 %v48
    %871 = vmatprep.subr.mxu0 %v53
    %872 = vmatpush1.msra.mxu0 %v52
    %873 = vmatprep.subr.mxu0 %v57
    %874 = vmatpush1.msra.mxu0 %v56
    %875 = vmatprep.subr.mxu0 %v61
    %876 = vmatpush1.msra.mxu0 %v60
    %877 = vmatprep.subr.mxu0 %v65
    %878 = vmatpush1.msra.mxu0 %v64
    %879 = vmatprep.subr.mxu0 %v69
    %880 = vmatpush1.msra.mxu0 %v68
    %881 = vmatprep.subr.mxu0 %v73
    %882 = vmatpush1.msra.mxu0 %v72
    %883 = vmatprep.subr.mxu0 %v77
    %884 = vmatpush1.msra.mxu0 %v76
    %885 = vmatprep.subr.mxu0 %v81
    %886 = vmatpush1.msra.mxu0 %v80
    %887 = vmatprep.subr.mxu0 %v85
    %888 = vmatpush1.msra.mxu0 %v84
    %889 = vmatprep.subr.mxu0 %v89
    %890 = vmatpush1.msra.mxu0 %v88
    %891 = vmatprep.subr.mxu0 %v93
    %892 = vmatpush1.msra.mxu0 %v92
    %893 = vmatprep.subr.mxu0 %v97
    %894 = vmatpush1.msra.mxu0 %v96
    %895 = vmatprep.subr.mxu0 %v101
    %896 = vmatpush1.msra.mxu0 %v100
    %897 = vmatprep.subr.mxu0 %v105
    %898 = vmatpush1.msra.mxu0 %v104
    %899 = vmatprep.subr.mxu0 %v109
    %900 = vmatpush1.msra.mxu0 %v108
    %901 = vmatprep.subr.mxu0 0.0
    %902 = vmatpush1.msra.mxu0 0.0
    %903 = vmatprep.subr.mxu0 0.0
    %904 = vmatpush1.msra.mxu0 0.0
    %905 = vmatprep.subr.mxu0 0.0
    %906 = vmatpush1.msra.mxu0 0.0
    %907 = vmatprep.subr.mxu0 0.0
    %908 = vmatpush1.msra.mxu0 0.0
    %909 = vmatprep.subr.mxu0 0.0
    %910 = vmatpush1.msra.mxu0 0.0
    %911 = vmatprep.subr.mxu0 0.0
    %912 = vmatpush1.msra.mxu0 0.0
    %913 = vmatprep.subr.mxu0 0.0
    %914 = vmatpush1.msra.mxu0 0.0
    %915 = vmatprep.subr.mxu0 0.0
    %916 = vmatpush1.msra.mxu0 0.0
    %917 = vmatprep.subr.mxu0 0.0
    %918 = vmatpush1.msra.mxu0 0.0
    %919 = vmatprep.subr.mxu0 0.0
    %920 = vmatpush1.msra.mxu0 0.0
    %921 = vmatprep.subr.mxu0 0.0
    %922 = vmatpush1.msra.mxu0 0.0
    %923 = vmatprep.subr.mxu0 0.0
    %924 = vmatpush1.msra.mxu0 0.0
    %925 = vmatprep.subr.mxu0 0.0
    %926 = vmatpush1.msra.mxu0 0.0
    %927 = vmatprep.subr.mxu0 0.0
    %928 = vmatpush1.msra.mxu0 0.0
    %929 = vmatprep.subr.mxu0 0.0
    %930 = vmatpush1.msra.mxu0 0.0
    %931 = vmatprep.subr.mxu0 0.0
    %932 = vmatpush1.msra.mxu0 0.0
    %933 = vmatprep.mubr.f32.mxu0 0.0
    %934 = vmatmul.mubr.f32.gmra.mrb[0].mxu0 %v792
    %v935 = vpop.f32.mrb[0].mxu0
    %v936 = vadd.f32 %v796, %v935
    %v937 = vpop.f32.mrb[0].mxu0
    %v938 = vadd.f32 %v797, %v937
    %939 = vdwg.mxu0
    %v940 = vmul.f32 %v865, 0.5
    %v941 = vtanh.pop %v940
    %v942 = vadd.f32 %v941, 1.0
    %v943 = vmul.f32 %v942, 0.5
    %v944 = vmul.f32 %v867, 0.5
    %v945 = vtanh.pop %v944
    %v946 = vadd.f32 %v945, 1.0
    %v947 = vmul.f32 %v946, 0.5
    %v948 = vtanh.pop %v936
    %v949 = vmul.f32 %v938, 0.5
    %v950 = vtanh.pop %v949
    %v951 = vadd.f32 %v950, 1.0
    %v952 = vmul.f32 %v951, 0.5
    %v953 = vld [vmem:[#allocation3] sm:$0xff]
    %v954 = vmul.f32 %v947, %v953
    %v955 = vmul.f32 %v943, %v948
    %v956 = vadd.f32 %v954, %v955
    %v957 = vtanh.pop %v956
    %v958 = vmul.f32 %v952, %v957
    %959 = vst [vmem:[#allocation3] sm:$0xff] %v956
    %960 = vst [vmem:[#allocation2] sm:$0xff] %v958
    %s961 = scalar_lea.vmem [#allocation9], 32
    %962 = vst [vmem:[%s961] sm:$0xff] %v958
    %v963 = vld [vmem:[#allocation2] sm:$0xff]
    %s964 = scalar_lea.vmem [#allocation4], 160
    %v965 = vld [vmem:[%s964] sm:$0xff]
    %v966 = vld [vmem:[%s964 + $0x8] sm:$0xff]
    %v967 = vld [vmem:[%s964 + $0x10] sm:$0xff]
    %v968 = vld [vmem:[%s964 + $0x18] sm:$0xff]
    %969 = vmatprep.subr.mxu0 %v47
    %970 = vmatpush1.msra.mxu0 %v46
    %971 = vmatprep.subr.mxu0 %v51
    %972 = vmatpush1.msra.mxu0 %v50
    %973 = vmatprep.subr.mxu0 %v55
    %974 = vmatpush1.msra.mxu0 %v54
    %975 = vmatprep.subr.mxu0 %v59
    %976 = vmatpush1.msra.mxu0 %v58
    %977 = vmatprep.subr.mxu0 %v63
    %978 = vmatpush1.msra.mxu0 %v62
    %979 = vmatprep.subr.mxu0 %v67
    %980 = vmatpush1.msra.mxu0 %v66
    %981 = vmatprep.subr.mxu0 %v71
    %982 = vmatpush1.msra.mxu0 %v70
    %983 = vmatprep.subr.mxu0 %v75
    %984 = vmatpush1.msra.mxu0 %v74
    %985 = vmatprep.subr.mxu0 %v79
    %986 = vmatpush1.msra.mxu0 %v78
    %987 = vmatprep.subr.mxu0 %v83
    %988 = vmatpush1.msra.mxu0 %v82
    %989 = vmatprep.subr.mxu0 %v87
    %990 = vmatpush1.msra.mxu0 %v86
    %991 = vmatprep.subr.mxu0 %v91
    %992 = vmatpush1.msra.mxu0 %v90
    %993 = vmatprep.subr.mxu0 %v95
    %994 = vmatpush1.msra.mxu0 %v94
    %995 = vmatprep.subr.mxu0 %v99
    %996 = vmatpush1.msra.mxu0 %v98
    %997 = vmatprep.subr.mxu0 %v103
    %998 = vmatpush1.msra.mxu0 %v102
    %999 = vmatprep.subr.mxu0 %v107
    %1000 = vmatpush1.msra.mxu0 %v106
    %1001 = vmatprep.subr.mxu0 0.0
    %1002 = vmatpush1.msra.mxu0 0.0
    %1003 = vmatprep.subr.mxu0 0.0
    %1004 = vmatpush1.msra.mxu0 0.0
    %1005 = vmatprep.subr.mxu0 0.0
    %1006 = vmatpush1.msra.mxu0 0.0
    %1007 = vmatprep.subr.mxu0 0.0
    %1008 = vmatpush1.msra.mxu0 0.0
    %1009 = vmatprep.subr.mxu0 0.0
    %1010 = vmatpush1.msra.mxu0 0.0
    %1011 = vmatprep.subr.mxu0 0.0
    %1012 = vmatpush1.msra.mxu0 0.0
    %1013 = vmatprep.subr.mxu0 0.0
    %1014 = vmatpush1.msra.mxu0 0.0
    %1015 = vmatprep.subr.mxu0 0.0
    %1016 = vmatpush1.msra.mxu0 0.0
    %1017 = vmatprep.subr.mxu0 0.0
    %1018 = vmatpush1.msra.mxu0 0.0
    %1019 = vmatprep.subr.mxu0 0.0
    %1020 = vmatpush1.msra.mxu0 0.0
    %1021 = vmatprep.subr.mxu0 0.0
    %1022 = vmatpush1.msra.mxu0 0.0
    %1023 = vmatprep.subr.mxu0 0.0
    %1024 = vmatpush1.msra.mxu0 0.0
    %1025 = vmatprep.subr.mxu0 0.0
    %1026 = vmatpush1.msra.mxu0 0.0
    %1027 = vmatprep.subr.mxu0 0.0
    %1028 = vmatpush1.msra.mxu0 0.0
    %1029 = vmatprep.subr.mxu0 0.0
    %1030 = vmatpush1.msra.mxu0 0.0
    %1031 = vmatprep.subr.mxu0 0.0
    %1032 = vmatpush1.msra.mxu0 0.0
    %1033 = vmatprep.mubr.f32.mxu0 0.0
    %1034 = vmatmul.mubr.f32.gmra.mrb[0].mxu0 %v963
    %v1035 = vpop.f32.mrb[0].mxu0
    %v1036 = vadd.f32 %v965, %v1035
    %v1037 = vpop.f32.mrb[0].mxu0
    %v1038 = vadd.f32 %v966, %v1037
    %1039 = vdwg.mxu0
    %1040 = vmatprep.subr.mxu0 %v49
    %1041 = vmatpush1.msra.mxu0 %v48
    %1042 = vmatprep.subr.mxu0 %v53
    %1043 = vmatpush1.msra.mxu0 %v52
    %1044 = vmatprep.subr.mxu0 %v57
    %1045 = vmatpush1.msra.mxu0 %v56
    %1046 = vmatprep.subr.mxu0 %v61
    %1047 = vmatpush1.msra.mxu0 %v60
    %1048 = vmatprep.subr.mxu0 %v65
    %1049 = vmatpush1.msra.mxu0 %v64
    %1050 = vmatprep.subr.mxu0 %v69
    %1051 = vmatpush1.msra.mxu0 %v68
    %1052 = vmatprep.subr.mxu0 %v73
    %1053 = vmatpush1.msra.mxu0 %v72
    %1054 = vmatprep.subr.mxu0 %v77
    %1055 = vmatpush1.msra.mxu0 %v76
    %1056 = vmatprep.subr.mxu0 %v81
    %1057 = vmatpush1.msra.mxu0 %v80
    %1058 = vmatprep.subr.mxu0 %v85
    %1059 = vmatpush1.msra.mxu0 %v84
    %1060 = vmatprep.subr.mxu0 %v89
    %1061 = vmatpush1.msra.mxu0 %v88
    %1062 = vmatprep.subr.mxu0 %v93
    %1063 = vmatpush1.msra.mxu0 %v92
    %1064 = vmatprep.subr.mxu0 %v97
    %1065 = vmatpush1.msra.mxu0 %v96
    %1066 = vmatprep.subr.mxu0 %v101
    %1067 = vmatpush1.msra.mxu0 %v100
    %1068 = vmatprep.subr.mxu0 %v105
    %1069 = vmatpush1.msra.mxu0 %v104
    %1070 = vmatprep.subr.mxu0 %v109
    %1071 = vmatpush1.msra.mxu0 %v108
    %1072 = vmatprep.subr.mxu0 0.0
    %1073 = vmatpush1.msra.mxu0 0.0
    %1074 = vmatprep.subr.mxu0 0.0
    %1075 = vmatpush1.msra.mxu0 0.0
    %1076 = vmatprep.subr.mxu0 0.0
    %1077 = vmatpush1.msra.mxu0 0.0
    %1078 = vmatprep.subr.mxu0 0.0
    %1079 = vmatpush1.msra.mxu0 0.0
    %1080 = vmatprep.subr.mxu0 0.0
    %1081 = vmatpush1.msra.mxu0 0.0
    %1082 = vmatprep.subr.mxu0 0.0
    %1083 = vmatpush1.msra.mxu0 0.0
    %1084 = vmatprep.subr.mxu0 0.0
    %1085 = vmatpush1.msra.mxu0 0.0
    %1086 = vmatprep.subr.mxu0 0.0
    %1087 = vmatpush1.msra.mxu0 0.0
    %1088 = vmatprep.subr.mxu0 0.0
    %1089 = vmatpush1.msra.mxu0 0.0
    %1090 = vmatprep.subr.mxu0 0.0
    %1091 = vmatpush1.msra.mxu0 0.0
    %1092 = vmatprep.subr.mxu0 0.0
    %1093 = vmatpush1.msra.mxu0 0.0
    %1094 = vmatprep.subr.mxu0 0.0
    %1095 = vmatpush1.msra.mxu0 0.0
    %1096 = vmatprep.subr.mxu0 0.0
    %1097 = vmatpush1.msra.mxu0 0.0
    %1098 = vmatprep.subr.mxu0 0.0
    %1099 = vmatpush1.msra.mxu0 0.0
    %1100 = vmatprep.subr.mxu0 0.0
    %1101 = vmatpush1.msra.mxu0 0.0
    %1102 = vmatprep.subr.mxu0 0.0
    %1103 = vmatpush1.msra.mxu0 0.0
    %1104 = vmatprep.mubr.f32.mxu0 0.0
    %1105 = vmatmul.mubr.f32.gmra.mrb[0].mxu0 %v963
    %v1106 = vpop.f32.mrb[0].mxu0
    %v1107 = vadd.f32 %v967, %v1106
    %v1108 = vpop.f32.mrb[0].mxu0
    %v1109 = vadd.f32 %v968, %v1108
    %1110 = vdwg.mxu0
    %v1111 = vmul.f32 %v1036, 0.5
    %v1112 = vtanh.pop %v1111
    %v1113 = vadd.f32 %v1112, 1.0
    %v1114 = vmul.f32 %v1113, 0.5
    %v1115 = vmul.f32 %v1038, 0.5
    %v1116 = vtanh.pop %v1115
    %v1117 = vadd.f32 %v1116, 1.0
    %v1118 = vmul.f32 %v1117, 0.5
    %v1119 = vtanh.pop %v1107
    %v1120 = vmul.f32 %v1109, 0.5
    %v1121 = vtanh.pop %v1120
    %v1122 = vadd.f32 %v1121, 1.0
    %v1123 = vmul.f32 %v1122, 0.5
    %v1124 = vld [vmem:[#allocation3] sm:$0xff]
    %v1125 = vmul.f32 %v1118, %v1124
    %v1126 = vmul.f32 %v1114, %v1119
    %v1127 = vadd.f32 %v1125, %v1126
    %v1128 = vtanh.pop %v1127
    %v1129 = vmul.f32 %v1123, %v1128
    %1130 = vst [vmem:[#allocation3] sm:$0xff] %v1127
    %1131 = vst [vmem:[#allocation2] sm:$0xff] %v1129
    %s1132 = scalar_lea.vmem [#allocation9], 40
    %1133 = vst [vmem:[%s1132] sm:$0xff] %v1129
    %v1134 = vld [vmem:[#allocation2] sm:$0xff]
    %s1135 = scalar_lea.vmem [#allocation4], 192
    %v1136 = vld [vmem:[%s1135] sm:$0xff]
    %v1137 = vld [vmem:[%s1135 + $0x8] sm:$0xff]
    %v1138 = vld [vmem:[%s1135 + $0x10] sm:$0xff]
    %v1139 = vld [vmem:[%s1135 + $0x18] sm:$0xff]
    %1140 = vmatprep.subr.mxu0 %v47
    %1141 = vmatpush1.msra.mxu0 %v46
    %1142 = vmatprep.subr.mxu0 %v51
    %1143 = vmatpush1.msra.mxu0 %v50
    %1144 = vmatprep.subr.mxu0 %v55
    %1145 = vmatpush1.msra.mxu0 %v54
    %1146 = vmatprep.subr.mxu0 %v59
    %1147 = vmatpush1.msra.mxu0 %v58
    %1148 = vmatprep.subr.mxu0 %v63
    %1149 = vmatpush1.msra.mxu0 %v62
    %1150 = vmatprep.subr.mxu0 %v67
    %1151 = vmatpush1.msra.mxu0 %v66
    %1152 = vmatprep.subr.mxu0 %v71
    %1153 = vmatpush1.msra.mxu0 %v70
    %1154 = vmatprep.subr.mxu0 %v75
    %1155 = vmatpush1.msra.mxu0 %v74
    %1156 = vmatprep.subr.mxu0 %v79
    %1157 = vmatpush1.msra.mxu0 %v78
    %1158 = vmatprep.subr.mxu0 %v83
    %1159 = vmatpush1.msra.mxu0 %v82
    %1160 = vmatprep.subr.mxu0 %v87
    %1161 = vmatpush1.msra.mxu0 %v86
    %1162 = vmatprep.subr.mxu0 %v91
    %1163 = vmatpush1.msra.mxu0 %v90
    %1164 = vmatprep.subr.mxu0 %v95
    %1165 = vmatpush1.msra.mxu0 %v94
    %1166 = vmatprep.subr.mxu0 %v99
    %1167 = vmatpush1.msra.mxu0 %v98
    %1168 = vmatprep.subr.mxu0 %v103
    %1169 = vmatpush1.msra.mxu0 %v102
    %1170 = vmatprep.subr.mxu0 %v107
    %1171 = vmatpush1.msra.mxu0 %v106
    %1172 = vmatprep.subr.mxu0 0.0
    %1173 = vmatpush1.msra.mxu0 0.0
    %1174 = vmatprep.subr.mxu0 0.0
    %1175 = vmatpush1.msra.mxu0 0.0
    %1176 = vmatprep.subr.mxu0 0.0
    %1177 = vmatpush1.msra.mxu0 0.0
    %1178 = vmatprep.subr.mxu0 0.0
    %1179 = vmatpush1.msra.mxu0 0.0
    %1180 = vmatprep.subr.mxu0 0.0
    %1181 = vmatpush1.msra.mxu0 0.0
    %1182 = vmatprep.subr.mxu0 0.0
    %1183 = vmatpush1.msra.mxu0 0.0
    %1184 = vmatprep.subr.mxu0 0.0
    %1185 = vmatpush1.msra.mxu0 0.0
    %1186 = vmatprep.subr.mxu0 0.0
    %1187 = vmatpush1.msra.mxu0 0.0
    %1188 = vmatprep.subr.mxu0 0.0
    %1189 = vmatpush1.msra.mxu0 0.0
    %1190 = vmatprep.subr.mxu0 0.0
    %1191 = vmatpush1.msra.mxu0 0.0
    %1192 = vmatprep.subr.mxu0 0.0
    %1193 = vmatpush1.msra.mxu0 0.0
    %1194 = vmatprep.subr.mxu0 0.0
    %1195 = vmatpush1.msra.mxu0 0.0
    %1196 = vmatprep.subr.mxu0 0.0
    %1197 = vmatpush1.msra.mxu0 0.0
    %1198 = vmatprep.subr.mxu0 0.0
    %1199 = vmatpush1.msra.mxu0 0.0
    %1200 = vmatprep.subr.mxu0 0.0
    %1201 = vmatpush1.msra.mxu0 0.0
    %1202 = vmatprep.subr.mxu0 0.0
    %1203 = vmatpush1.msra.mxu0 0.0
    %1204 = vmatprep.mubr.f32.mxu0 0.0
    %1205 = vmatmul.mubr.f32.gmra.mrb[0].mxu0 %v1134
    %v1206 = vpop.f32.mrb[0].mxu0
    %v1207 = vadd.f32 %v1136, %v1206
    %v1208 = vpop.f32.mrb[0].mxu0
    %v1209 = vadd.f32 %v1137, %v1208
    %1210 = vdwg.mxu0
    %1211 = vmatprep.subr.mxu0 %v49
    %1212 = vmatpush1.msra.mxu0 %v48
    %1213 = vmatprep.subr.mxu0 %v53
    %1214 = vmatpush1.msra.mxu0 %v52
    %1215 = vmatprep.subr.mxu0 %v57
    %1216 = vmatpush1.msra.mxu0 %v56
    %1217 = vmatprep.subr.mxu0 %v61
    %1218 = vmatpush1.msra.mxu0 %v60
    %1219 = vmatprep.subr.mxu0 %v65
    %1220 = vmatpush1.msra.mxu0 %v64
    %1221 = vmatprep.subr.mxu0 %v69
    %1222 = vmatpush1.msra.mxu0 %v68
    %1223 = vmatprep.subr.mxu0 %v73
    %1224 = vmatpush1.msra.mxu0 %v72
    %1225 = vmatprep.subr.mxu0 %v77
    %1226 = vmatpush1.msra.mxu0 %v76
    %1227 = vmatprep.subr.mxu0 %v81
    %1228 = vmatpush1.msra.mxu0 %v80
    %1229 = vmatprep.subr.mxu0 %v85
    %1230 = vmatpush1.msra.mxu0 %v84
    %1231 = vmatprep.subr.mxu0 %v89
    %1232 = vmatpush1.msra.mxu0 %v88
    %1233 = vmatprep.subr.mxu0 %v93
    %1234 = vmatpush1.msra.mxu0 %v92
    %1235 = vmatprep.subr.mxu0 %v97
    %1236 = vmatpush1.msra.mxu0 %v96
    %1237 = vmatprep.subr.mxu0 %v101
    %1238 = vmatpush1.msra.mxu0 %v100
    %1239 = vmatprep.subr.mxu0 %v105
    %1240 = vmatpush1.msra.mxu0 %v104
    %1241 = vmatprep.subr.mxu0 %v109
    %1242 = vmatpush1.msra.mxu0 %v108
    %1243 = vmatprep.subr.mxu0 0.0
    %1244 = vmatpush1.msra.mxu0 0.0
    %1245 = vmatprep.subr.mxu0 0.0
    %1246 = vmatpush1.msra.mxu0 0.0
    %1247 = vmatprep.subr.mxu0 0.0
    %1248 = vmatpush1.msra.mxu0 0.0
    %1249 = vmatprep.subr.mxu0 0.0
    %1250 = vmatpush1.msra.mxu0 0.0
    %1251 = vmatprep.subr.mxu0 0.0
    %1252 = vmatpush1.msra.mxu0 0.0
    %1253 = vmatprep.subr.mxu0 0.0
    %1254 = vmatpush1.msra.mxu0 0.0
    %1255 = vmatprep.subr.mxu0 0.0
    %1256 = vmatpush1.msra.mxu0 0.0
    %1257 = vmatprep.subr.mxu0 0.0
    %1258 = vmatpush1.msra.mxu0 0.0
    %1259 = vmatprep.subr.mxu0 0.0
    %1260 = vmatpush1.msra.mxu0 0.0
    %1261 = vmatprep.subr.mxu0 0.0
    %1262 = vmatpush1.msra.mxu0 0.0
    %1263 = vmatprep.subr.mxu0 0.0
    %1264 = vmatpush1.msra.mxu0 0.0
    %1265 = vmatprep.subr.mxu0 0.0
    %1266 = vmatpush1.msra.mxu0 0.0
    %1267 = vmatprep.subr.mxu0 0.0
    %1268 = vmatpush1.msra.mxu0 0.0
    %1269 = vmatprep.subr.mxu0 0.0
    %1270 = vmatpush1.msra.mxu0 0.0
    %1271 = vmatprep.subr.mxu0 0.0
    %1272 = vmatpush1.msra.mxu0 0.0
    %1273 = vmatprep.subr.mxu0 0.0
    %1274 = vmatpush1.msra.mxu0 0.0
    %1275 = vmatprep.mubr.f32.mxu0 0.0
    %1276 = vmatmul.mubr.f32.gmra.mrb[0].mxu0 %v1134
    %v1277 = vpop.f32.mrb[0].mxu0
    %v1278 = vadd.f32 %v1138, %v1277
    %v1279 = vpop.f32.mrb[0].mxu0
    %v1280 = vadd.f32 %v1139, %v1279
    %1281 = vdwg.mxu0
    %v1282 = vmul.f32 %v1207, 0.5
    %v1283 = vtanh.pop %v1282
    %v1284 = vadd.f32 %v1283, 1.0
    %v1285 = vmul.f32 %v1284, 0.5
    %v1286 = vmul.f32 %v1209, 0.5
    %v1287 = vtanh.pop %v1286
    %v1288 = vadd.f32 %v1287, 1.0
    %v1289 = vmul.f32 %v1288, 0.5
    %v1290 = vtanh.pop %v1278
    %v1291 = vmul.f32 %v1280, 0.5
    %v1292 = vtanh.pop %v1291
    %v1293 = vadd.f32 %v1292, 1.0
    %v1294 = vmul.f32 %v1293, 0.5
    %v1295 = vld [vmem:[#allocation3] sm:$0xff]
    %v1296 = vmul.f32 %v1289, %v1295
    %v1297 = vmul.f32 %v1285, %v1290
    %v1298 = vadd.f32 %v1296, %v1297
    %v1299 = vtanh.pop %v1298
    %v1300 = vmul.f32 %v1294, %v1299
    %1301 = vst [vmem:[#allocation3] sm:$0xff] %v1298
    %1302 = vst [vmem:[#allocation2] sm:$0xff] %v1300
    %s1303 = scalar_lea.vmem [#allocation9], 48
    %1304 = vst [vmem:[%s1303] sm:$0xff] %v1300
    %v1305 = vld [vmem:[#allocation2] sm:$0xff]
    %s1306 = scalar_lea.vmem [#allocation4], 224
    %v1307 = vld [vmem:[%s1306] sm:$0xff]
    %v1308 = vld [vmem:[%s1306 + $0x8] sm:$0xff]
    %v1309 = vld [vmem:[%s1306 + $0x10] sm:$0xff]
    %v1310 = vld [vmem:[%s1306 + $0x18] sm:$0xff]
    %1311 = vmatprep.subr.mxu0 %v47
    %1312 = vmatpush1.msra.mxu0 %v46
    %1313 = vmatprep.subr.mxu0 %v51
    %1314 = vmatpush1.msra.mxu0 %v50
    %1315 = vmatprep.subr.mxu0 %v55
    %1316 = vmatpush1.msra.mxu0 %v54
    %1317 = vmatprep.subr.mxu0 %v59
    %1318 = vmatpush1.msra.mxu0 %v58
    %1319 = vmatprep.subr.mxu0 %v63
    %1320 = vmatpush1.msra.mxu0 %v62
    %1321 = vmatprep.subr.mxu0 %v67
    %1322 = vmatpush1.msra.mxu0 %v66
    %1323 = vmatprep.subr.mxu0 %v71
    %1324 = vmatpush1.msra.mxu0 %v70
    %1325 = vmatprep.subr.mxu0 %v75
    %1326 = vmatpush1.msra.mxu0 %v74
    %1327 = vmatprep.subr.mxu0 %v79
    %1328 = vmatpush1.msra.mxu0 %v78
    %1329 = vmatprep.subr.mxu0 %v83
    %1330 = vmatpush1.msra.mxu0 %v82
    %1331 = vmatprep.subr.mxu0 %v87
    %1332 = vmatpush1.msra.mxu0 %v86
    %1333 = vmatprep.subr.mxu0 %v91
    %1334 = vmatpush1.msra.mxu0 %v90
    %1335 = vmatprep.subr.mxu0 %v95
    %1336 = vmatpush1.msra.mxu0 %v94
    %1337 = vmatprep.subr.mxu0 %v99
    %1338 = vmatpush1.msra.mxu0 %v98
    %1339 = vmatprep.subr.mxu0 %v103
    %1340 = vmatpush1.msra.mxu0 %v102
    %1341 = vmatprep.subr.mxu0 %v107
    %1342 = vmatpush1.msra.mxu0 %v106
    %1343 = vmatprep.subr.mxu0 0.0
    %1344 = vmatpush1.msra.mxu0 0.0
    %1345 = vmatprep.subr.mxu0 0.0
    %1346 = vmatpush1.msra.mxu0 0.0
    %1347 = vmatprep.subr.mxu0 0.0
    %1348 = vmatpush1.msra.mxu0 0.0
    %1349 = vmatprep.subr.mxu0 0.0
    %1350 = vmatpush1.msra.mxu0 0.0
    %1351 = vmatprep.subr.mxu0 0.0
    %1352 = vmatpush1.msra.mxu0 0.0
    %1353 = vmatprep.subr.mxu0 0.0
    %1354 = vmatpush1.msra.mxu0 0.0
    %1355 = vmatprep.subr.mxu0 0.0
    %1356 = vmatpush1.msra.mxu0 0.0
    %1357 = vmatprep.subr.mxu0 0.0
    %1358 = vmatpush1.msra.mxu0 0.0
    %1359 = vmatprep.subr.mxu0 0.0
    %1360 = vmatpush1.msra.mxu0 0.0
    %1361 = vmatprep.subr.mxu0 0.0
    %1362 = vmatpush1.msra.mxu0 0.0
    %1363 = vmatprep.subr.mxu0 0.0
    %1364 = vmatpush1.msra.mxu0 0.0
    %1365 = vmatprep.subr.mxu0 0.0
    %1366 = vmatpush1.msra.mxu0 0.0
    %1367 = vmatprep.subr.mxu0 0.0
    %1368 = vmatpush1.msra.mxu0 0.0
    %1369 = vmatprep.subr.mxu0 0.0
    %1370 = vmatpush1.msra.mxu0 0.0
    %1371 = vmatprep.subr.mxu0 0.0
    %1372 = vmatpush1.msra.mxu0 0.0
    %1373 = vmatprep.subr.mxu0 0.0
    %1374 = vmatpush1.msra.mxu0 0.0
    %1375 = vmatprep.mubr.f32.mxu0 0.0
    %1376 = vmatmul.mubr.f32.gmra.mrb[0].mxu0 %v1305
    %v1377 = vpop.f32.mrb[0].mxu0
    %v1378 = vadd.f32 %v1307, %v1377
    %v1379 = vpop.f32.mrb[0].mxu0
    %v1380 = vadd.f32 %v1308, %v1379
    %1381 = vdwg.mxu0
    %1382 = vmatprep.subr.mxu0 %v49
    %1383 = vmatpush1.msra.mxu0 %v48
    %1384 = vmatprep.subr.mxu0 %v53
    %1385 = vmatpush1.msra.mxu0 %v52
    %1386 = vmatprep.subr.mxu0 %v57
    %1387 = vmatpush1.msra.mxu0 %v56
    %1388 = vmatprep.subr.mxu0 %v61
    %1389 = vmatpush1.msra.mxu0 %v60
    %1390 = vmatprep.subr.mxu0 %v65
    %1391 = vmatpush1.msra.mxu0 %v64
    %1392 = vmatprep.subr.mxu0 %v69
    %1393 = vmatpush1.msra.mxu0 %v68
    %1394 = vmatprep.subr.mxu0 %v73
    %1395 = vmatpush1.msra.mxu0 %v72
    %1396 = vmatprep.subr.mxu0 %v77
    %1397 = vmatpush1.msra.mxu0 %v76
    %1398 = vmatprep.subr.mxu0 %v81
    %1399 = vmatpush1.msra.mxu0 %v80
    %1400 = vmatprep.subr.mxu0 %v85
    %1401 = vmatpush1.msra.mxu0 %v84
    %1402 = vmatprep.subr.mxu0 %v89
    %1403 = vmatpush1.msra.mxu0 %v88
    %1404 = vmatprep.subr.mxu0 %v93
    %1405 = vmatpush1.msra.mxu0 %v92
    %1406 = vmatprep.subr.mxu0 %v97
    %1407 = vmatpush1.msra.mxu0 %v96
    %1408 = vmatprep.subr.mxu0 %v101
    %1409 = vmatpush1.msra.mxu0 %v100
    %1410 = vmatprep.subr.mxu0 %v105
    %1411 = vmatpush1.msra.mxu0 %v104
    %1412 = vmatprep.subr.mxu0 %v109
    %1413 = vmatpush1.msra.mxu0 %v108
    %1414 = vmatprep.subr.mxu0 0.0
    %1415 = vmatpush1.msra.mxu0 0.0
    %1416 = vmatprep.subr.mxu0 0.0
    %1417 = vmatpush1.msra.mxu0 0.0
    %1418 = vmatprep.subr.mxu0 0.0
    %1419 = vmatpush1.msra.mxu0 0.0
    %1420 = vmatprep.subr.mxu0 0.0
    %1421 = vmatpush1.msra.mxu0 0.0
    %1422 = vmatprep.subr.mxu0 0.0
    %1423 = vmatpush1.msra.mxu0 0.0
    %1424 = vmatprep.subr.mxu0 0.0
    %1425 = vmatpush1.msra.mxu0 0.0
    %1426 = vmatprep.subr.mxu0 0.0
    %1427 = vmatpush1.msra.mxu0 0.0
    %1428 = vmatprep.subr.mxu0 0.0
    %1429 = vmatpush1.msra.mxu0 0.0
    %1430 = vmatprep.subr.mxu0 0.0
    %1431 = vmatpush1.msra.mxu0 0.0
    %1432 = vmatprep.subr.mxu0 0.0
    %1433 = vmatpush1.msra.mxu0 0.0
    %1434 = vmatprep.subr.mxu0 0.0
    %1435 = vmatpush1.msra.mxu0 0.0
    %1436 = vmatprep.subr.mxu0 0.0
    %1437 = vmatpush1.msra.mxu0 0.0
    %1438 = vmatprep.subr.mxu0 0.0
    %1439 = vmatpush1.msra.mxu0 0.0
    %1440 = vmatprep.subr.mxu0 0.0
    %1441 = vmatpush1.msra.mxu0 0.0
    %1442 = vmatprep.subr.mxu0 0.0
    %1443 = vmatpush1.msra.mxu0 0.0
    %1444 = vmatprep.subr.mxu0 0.0
    %1445 = vmatpush1.msra.mxu0 0.0
    %1446 = vmatprep.mubr.f32.mxu0 0.0
    %1447 = vmatmul.mubr.f32.gmra.mrb[0].mxu0 %v1305
    %v1448 = vpop.f32.mrb[0].mxu0
    %v1449 = vadd.f32 %v1309, %v1448
    %v1450 = vpop.f32.mrb[0].mxu0
    %v1451 = vadd.f32 %v1310, %v1450
    %1452 = vdwg.mxu0
    %v1453 = vmul.f32 %v1378, 0.5
    %v1454 = vtanh.pop %v1453
    %v1455 = vadd.f32 %v1454, 1.0
    %v1456 = vmul.f32 %v1455, 0.5
    %v1457 = vmul.f32 %v1380, 0.5
    %v1458 = vtanh.pop %v1457
    %v1459 = vadd.f32 %v1458, 1.0
    %v1460 = vmul.f32 %v1459, 0.5
    %v1461 = vtanh.pop %v1449
    %v1462 = vmul.f32 %v1451, 0.5
    %v1463 = vtanh.pop %v1462
    %v1464 = vadd.f32 %v1463, 1.0
    %v1465 = vmul.f32 %v1464, 0.5
    %v1466 = vld [vmem:[#allocation3] sm:$0xff]
    %v1467 = vmul.f32 %v1460, %v1466
    %v1468 = vmul.f32 %v1456, %v1461
    %v1469 = vadd.f32 %v1467, %v1468
    %v1470 = vtanh.pop %v1469
    %v1471 = vmul.f32 %v1465, %v1470
    %1472 = vst [vmem:[#allocation3] sm:$0xff] %v1469
    %1473 = vst [vmem:[#allocation2] sm:$0xff] %v1471
    %s1474 = scalar_lea.vmem [#allocation9], 56
    %1475 = vst [vmem:[%s1474] sm:$0xff] %v1471
    // Predicated region
    $region22: #{tpu_custom_call.1} parent=1 // pred_check
      _
    $region23: #{tpu_custom_call.1} parent=1 // pred_check_branch
      %1477 = sbr.rel (0) target = $region25
    $region24: #{tpu_custom_call.1} parent=1 // pred_region
      %s1479 = ssub.s32 1024, 1024
      %1480 = vsyncadd [#allocation6], %s1479
      %s1481 = sshll.u32 [#allocation9], 4
      %s1482 = int_to_ptr.vmem [resolvable:$true] %s1481
      %1487 = dma.vmem_to_hbm [thread:$0]  %s1482, 1024, %s2, [#allocation6], 128, 128, 8
    $region25: #{tpu_custom_call.1} parent=1 // pred_fallthru
      _
    // Predicated region
    $region26: #{tpu_custom_call.1} parent=1 // pred_check
      _
    $region27: #{tpu_custom_call.1} parent=1 // pred_check_branch
      %1489 = sbr.rel (0) target = $region29
    $region28: #{tpu_custom_call.1} parent=1 // pred_region
      %1490 = dma.done [#allocation6], 1024
    $region29: #{tpu_custom_call.1} parent=1 // pred_fallthru
      _
    %1491 = vsyncpa [#allocation5], 1
    %1492 = vsyncpa [#allocation8], 1
    %1493 = vsyncpa [#allocation6], 1

</llo_original>
